<compile_context>
chip_gen: v7x
topology: tpu7x:2x2x1
jax: 0.10.0
libtpu: 0.0.40
codegen_flags: <defaults>
</compile_context>

<pallas_src>
import functools

import jax
import jax.numpy as jnp
from jax.experimental import pallas as pl
from jax.experimental.pallas import tpu as pltpu


def _round_up(x, m):
    return (x + m - 1) // m * m


def _conv_tap_kernel(w_ref, b_ref, x_ref, o_ref, acc_ref, *, mr, we):
    """One grid step = one temporal tap kt of one output frame (b, t).

    x_ref:   (1, 1, 4, P, C_in)      bf16  phase-split flattened input frame
    w_ref:   (27, C_in, C_out_pad)   bf16  resident weights, tap-major
    b_ref:   (1, C_out_pad)          f32   resident bias
    o_ref:   (1, 1, Mr, C_out_pad)         output frame (bf16)
    acc_ref: (Mr, C_out_pad)         f32   accumulator across kt
    """
    kt = pl.program_id(2)

    # Bias-folded accumulator init on the first temporal tap.
    @pl.when(kt == 0)
    def _():
        acc_ref[...] = jnp.broadcast_to(b_ref[...], acc_ref.shape)

    # 9 spatial taps = 9 contiguous row-slices of the flattened phase tensor.
    part = None
    for kh in range(3):
        for kw in range(3):
            p = (kh % 2) * 2 + (kw % 2)             # which (H,W) parity phase
            start = (kh // 2) * we + (kw // 2)      # pure row offset in flat layout
            xt = x_ref[0, 0, p, start:start + mr, :]          # (Mr, C_in) bf16
            wt = w_ref[kt * 9 + kh * 3 + kw]                   # (C_in, C_out_pad) bf16
            d = jnp.dot(xt, wt, preferred_element_type=jnp.float32)
            part = d if part is None else part + d
    acc_ref[...] += part

    # Finalise on the last temporal tap: single cast + lane-dense store.
    @pl.when(kt == 2)
    def _():
        o_ref[0, 0] = acc_ref[...].astype(o_ref.dtype)


def easyanimate_downsampler3d(x, weight, bias, out_dtype=jnp.bfloat16):
    """x: (B, C_in, T, H, W). weight: (C_out, C_in, 3, 3, 3). bias: (C_out,)."""
    B, C_in, T, H, W = x.shape
    C_out = weight.shape[0]
    assert weight.shape == (C_out, C_in, 3, 3, 3)

    Tp = T + 2                         # causal replicate front-pad
    T_out = (Tp - 3) // 2 + 1
    H_out = (H + 1 - 3) // 2 + 1       # F.pad adds one row/col before the stride-2 conv
    W_out = (W + 1 - 3) // 2 + 1
    He, We = H_out + 1, W_out + 1      # even-phase extents
    P = (He + 1) * We                  # flattened phase rows (one slack phase-row)
    Mr = H_out * We                    # output rows per frame (col W_out of each row is junk)
    C_out_pad = _round_up(C_out, 128)  # lane-dense output / matmul N

    # ---- XLA-side layout plumbing (no im2col expansion) ----
    x_b = x.astype(jnp.bfloat16)
    # Zero-pad H,W (subsumes F.pad(x,(0,1,0,1)); extra rows/cols are zeros and only
    # ever land in the junk output column which is sliced off below).
    xpad = jnp.pad(x_b, ((0, 0), (0, 0), (0, 0),
                         (0, 2 * (He + 1) - H), (0, 2 * We - W)))
    # Causal replicate pad: two copies of frame 0 in front.
    xpad = jnp.concatenate([xpad[:, :, :1], xpad[:, :, :1], xpad], axis=2)
    # Channels-last + (H,W) even/odd phase split + flatten:
    #   xph[b, f, ph*2+pw, i*We + j, c] == xpad[b, c, f, 2i+ph, 2j+pw]
    xph = xpad.reshape(B, C_in, Tp, He + 1, 2, We, 2)
    xph = jnp.transpose(xph, (0, 2, 4, 6, 3, 5, 1)).reshape(B, Tp, 4, P, C_in)

    # weight: (C_out, C_in, kt, kh, kw) -> (kt*9+kh*3+kw, C_in, C_out_pad), bf16.
    w_col = jnp.transpose(weight, (2, 3, 4, 1, 0)).reshape(27, C_in, C_out)
    w_col = jnp.pad(w_col, ((0, 0), (0, 0), (0, C_out_pad - C_out))).astype(jnp.bfloat16)
    b_col = jnp.pad(bias.astype(jnp.float32), (0, C_out_pad - C_out)).reshape(1, C_out_pad)

    # ---- VMEM budget: resident weights + double-buffered act/out + f32 acc ----
    out_bytes = jnp.dtype(out_dtype).itemsize
    vmem_needed = (27 * C_in * C_out_pad * 2          # resident weights (bf16)
                   + 2 * 4 * P * C_in * 2             # double-buffered input frame (bf16)
                   + 2 * Mr * C_out_pad * out_bytes   # double-buffered output block
                   + Mr * C_out_pad * 4               # f32 accumulator scratch
                   + C_out_pad * 4)                   # bias
    vmem_limit = min(max(int(1.25 * vmem_needed) + (2 << 20), 16 << 20), 96 << 20)

    kernel = functools.partial(_conv_tap_kernel, mr=Mr, we=We)

    out = pl.pallas_call(
        kernel,
        out_shape=jax.ShapeDtypeStruct((B, T_out, Mr, C_out_pad), out_dtype),
        grid_spec=pltpu.PrefetchScalarGridSpec(
            num_scalar_prefetch=0,
            grid=(B, T_out, 3),
            in_specs=[
                pl.BlockSpec((27, C_in, C_out_pad), lambda b, t, kt: (0, 0, 0)),  # resident W
                pl.BlockSpec((1, C_out_pad), lambda b, t, kt: (0, 0)),            # resident bias
                pl.BlockSpec((1, 1, 4, P, C_in),
                             lambda b, t, kt: (b, 2 * t + kt, 0, 0, 0)),          # frame 2t+kt
            ],
            out_specs=pl.BlockSpec((1, 1, Mr, C_out_pad), lambda b, t, kt: (b, t, 0, 0)),
            scratch_shapes=[pltpu.VMEM((Mr, C_out_pad), jnp.float32)],
        ),
        compiler_params=pltpu.CompilerParams(
            dimension_semantics=("parallel", "parallel", "arbitrary"),
            vmem_limit_bytes=vmem_limit),
    )(w_col, b_col, xph)

    # Drop the junk column / channel padding; back to NCDHW (small, downsampled tensor).
    out = out.reshape(B, T_out, H_out, We, C_out_pad)[:, :, :, :W_out, :C_out]
    return jnp.transpose(out, (0, 4, 1, 2, 3))


def _reference(x, weight, bias):
    """Pure-JAX reference: same padding + standard strided conv3d."""
    xp = jnp.pad(x, ((0, 0), (0, 0), (0, 0), (0, 1), (0, 1)))
    xp = jnp.concatenate([xp[:, :, :1], xp[:, :, :1], xp], axis=2)
    out = jax.lax.conv_general_dilated(
        xp, weight, window_strides=(2, 2, 2), padding="VALID",
        dimension_numbers=("NCDHW", "OIDHW", "NCDHW"),
        precision=jax.lax.Precision.HIGHEST)
    return out + bias[None, :, None, None, None]


if __name__ == "__main__":
    B, C_in, C_out, T, H, W = 2, 4, 8, 8, 16, 16

    key = jax.random.PRNGKey(0)
    kx, kw_, kb = jax.random.split(key, 3)

    # Deterministic parameter init (PyTorch-style uniform bound = 1/sqrt(fan_in)).
    fan_in = C_in * 3 * 3 * 3
    bound = 1.0 / (fan_in ** 0.5)
    weight = jax.random.uniform(kw_, (C_out, C_in, 3, 3, 3), jnp.float32, -bound, bound)
    bias = jax.random.uniform(kb, (C_out,), jnp.float32, -bound, bound)
    x = jax.random.normal(kx, (B, C_in, T, H, W), jnp.float32)

    out = jax.block_until_ready(jax.jit(easyanimate_downsampler3d)(x, weight, bias))
    out_f32 = out.astype(jnp.float32)

    ref_f32 = jax.block_until_ready(_reference(x, weight, bias))
    assert out.shape == ref_f32.shape, (out.shape, ref_f32.shape)

    # Tight check: reference fed the same bf16-rounded operands (isolates
    # indexing/layout correctness from the bf16 quantization).
    xq = x.astype(jnp.bfloat16).astype(jnp.float32)
    wq = weight.astype(jnp.bfloat16).astype(jnp.float32)
    ref_q = _reference(xq, wq, bias)
    assert jnp.allclose(out_f32, ref_q, atol=1e-2, rtol=1e-2), \
        "mismatch vs bf16-quantized reference"

    # Loose check: full-f32 reference (bf16 activations/weights/output in the kernel).
    assert jnp.allclose(out_f32, ref_f32, atol=5e-2, rtol=5e-2), \
        "mismatch vs f32 reference"

    print("KERNEL_OK")
</pallas_src>

<mosaic_0001>
module attributes {stable_mosaic.version = 11 : i64} {
  func.func @_conv_tap_kernel(%arg0: i32, %arg1: i32, %arg2: i32, %arg3: memref<27x4x128xbf16, #tpu.memory_space<vmem>>, %arg4: memref<1x128xf32, #tpu.memory_space<vmem>>, %arg5: memref<1x1x4x90x4xbf16, #tpu.memory_space<vmem>>, %arg6: memref<1x1x72x128xbf16, #tpu.memory_space<vmem>>, %arg7: memref<72x128xf32, #tpu.memory_space<vmem>>) attributes {dimension_semantics = [#tpu.dimension_semantics<parallel>, #tpu.dimension_semantics<parallel>, #tpu.dimension_semantics<arbitrary>], iteration_bounds = array<i64: 2, 4, 3>, scalar_prefetch = 0 : i64, scratch_operands = 1 : i64, tpu.core_type = #tpu.core_type<tc>, window_params = [{pipeline_mode = #tpu.pipeline_mode<synchronous>, transform_indices = @transform_0, window_bounds = array<i64: 27, 4, 128>}, {pipeline_mode = #tpu.pipeline_mode<synchronous>, transform_indices = @transform_1, window_bounds = array<i64: 1, 128>}, {transform_indices = @transform_2, window_bounds = array<i64: 1, 1, 4, 90, 4>}, {transform_indices = @transform_3, window_bounds = array<i64: 1, 1, 72, 128>}]} {
    %c0_i32 = arith.constant 0 : i32
    %0 = arith.cmpi eq, %arg2, %c0_i32 : i32
    %1 = arith.extui %0 : i1 to i32
    %c0_i32_0 = arith.constant 0 : i32
    %2 = arith.cmpi ne, %1, %c0_i32_0 : i32
    scf.if %2 {
      %c0_94 = arith.constant 0 : index
      %c0_95 = arith.constant 0 : index
      %98 = vector.load %arg4[%c0_94, %c0_95] : memref<1x128xf32, #tpu.memory_space<vmem>>, vector<1x128xf32>
      %99 = vector.shape_cast %98 : vector<1x128xf32> to vector<1x128xf32>
      %100 = vector.broadcast %99 : vector<1x128xf32> to vector<72x128xf32>
      %c0_96 = arith.constant 0 : index
      %c0_97 = arith.constant 0 : index
      %101 = vector.load %arg7[%c0_96, %c0_97] : memref<72x128xf32, #tpu.memory_space<vmem>>, vector<72x128xf32>
      tpu.vector_store %arg7[%c0_96, %c0_97], %100 {strides = array<i32>} : memref<72x128xf32, #tpu.memory_space<vmem>>, vector<72x128xf32>,
    } else {
    }
    %c0 = arith.constant 0 : index
    %c0_1 = arith.constant 0 : index
    %c0_2 = arith.constant 0 : index
    %c0_3 = arith.constant 0 : index
    %c0_4 = arith.constant 0 : index
    %3 = vector.load %arg5[%c0, %c0_1, %c0_2, %c0_3, %c0_4] : memref<1x1x4x90x4xbf16, #tpu.memory_space<vmem>>, vector<1x1x1x72x4xbf16>
    %4 = vector.shape_cast %3 : vector<1x1x1x72x4xbf16> to vector<72x4xbf16>
    %c9_i32 = arith.constant 9 : i32
    %5 = arith.muli %arg2, %c9_i32 : i32
    %c0_i32_5 = arith.constant 0 : i32
    %6 = arith.addi %5, %c0_i32_5 : i32
    %c0_i32_6 = arith.constant 0 : i32
    %7 = arith.addi %6, %c0_i32_6 : i32
    %8 = arith.index_cast %7 : i32 to index
    %c0_7 = arith.constant 0 : index
    %c0_8 = arith.constant 0 : index
    %9 = vector.load %arg3[%8, %c0_7, %c0_8] : memref<27x4x128xbf16, #tpu.memory_space<vmem>>, vector<1x4x128xbf16>
    %10 = vector.shape_cast %9 : vector<1x4x128xbf16> to vector<4x128xbf16>
    %cst = arith.constant dense<0.000000e+00> : vector<72x128xf32>
    %11 = tpu.matmul %4, %10, %cst {dimension_numbers = #tpu.dot_dimension_numbers<[1], [0], [0], [1], [0, 0, 1, 1], [], []>} : vector<72x4xbf16>, vector<4x128xbf16>, vector<72x128xf32> -> vector<72x128xf32>
    %c0_9 = arith.constant 0 : index
    %c0_10 = arith.constant 0 : index
    %c1 = arith.constant 1 : index
    %c0_11 = arith.constant 0 : index
    %c0_12 = arith.constant 0 : index
    %12 = vector.load %arg5[%c0_9, %c0_10, %c1, %c0_11, %c0_12] : memref<1x1x4x90x4xbf16, #tpu.memory_space<vmem>>, vector<1x1x1x72x4xbf16>
    %13 = vector.shape_cast %12 : vector<1x1x1x72x4xbf16> to vector<72x4xbf16>
    %c9_i32_13 = arith.constant 9 : i32
    %14 = arith.muli %arg2, %c9_i32_13 : i32
    %c0_i32_14 = arith.constant 0 : i32
    %15 = arith.addi %14, %c0_i32_14 : i32
    %c1_i32 = arith.constant 1 : i32
    %16 = arith.addi %15, %c1_i32 : i32
    %17 = arith.index_cast %16 : i32 to index
    %c0_15 = arith.constant 0 : index
    %c0_16 = arith.constant 0 : index
    %18 = vector.load %arg3[%17, %c0_15, %c0_16] : memref<27x4x128xbf16, #tpu.memory_space<vmem>>, vector<1x4x128xbf16>
    %19 = vector.shape_cast %18 : vector<1x4x128xbf16> to vector<4x128xbf16>
    %cst_17 = arith.constant dense<0.000000e+00> : vector<72x128xf32>
    %20 = tpu.matmul %13, %19, %cst_17 {dimension_numbers = #tpu.dot_dimension_numbers<[1], [0], [0], [1], [0, 0, 1, 1], [], []>} : vector<72x4xbf16>, vector<4x128xbf16>, vector<72x128xf32> -> vector<72x128xf32>
    %21 = arith.addf %11, %20 : vector<72x128xf32>
    %c0_18 = arith.constant 0 : index
    %c0_19 = arith.constant 0 : index
    %c0_20 = arith.constant 0 : index
    %c1_21 = arith.constant 1 : index
    %c0_22 = arith.constant 0 : index
    %22 = vector.load %arg5[%c0_18, %c0_19, %c0_20, %c1_21, %c0_22] : memref<1x1x4x90x4xbf16, #tpu.memory_space<vmem>>, vector<1x1x1x72x4xbf16>
    %23 = vector.shape_cast %22 : vector<1x1x1x72x4xbf16> to vector<72x4xbf16>
    %c9_i32_23 = arith.constant 9 : i32
    %24 = arith.muli %arg2, %c9_i32_23 : i32
    %c0_i32_24 = arith.constant 0 : i32
    %25 = arith.addi %24, %c0_i32_24 : i32
    %c2_i32 = arith.constant 2 : i32
    %26 = arith.addi %25, %c2_i32 : i32
    %27 = arith.index_cast %26 : i32 to index
    %c0_25 = arith.constant 0 : index
    %c0_26 = arith.constant 0 : index
    %28 = vector.load %arg3[%27, %c0_25, %c0_26] : memref<27x4x128xbf16, #tpu.memory_space<vmem>>, vector<1x4x128xbf16>
    %29 = vector.shape_cast %28 : vector<1x4x128xbf16> to vector<4x128xbf16>
    %cst_27 = arith.constant dense<0.000000e+00> : vector<72x128xf32>
    %30 = tpu.matmul %23, %29, %cst_27 {dimension_numbers = #tpu.dot_dimension_numbers<[1], [0], [0], [1], [0, 0, 1, 1], [], []>} : vector<72x4xbf16>, vector<4x128xbf16>, vector<72x128xf32> -> vector<72x128xf32>
    %31 = arith.addf %21, %30 : vector<72x128xf32>
    %c0_28 = arith.constant 0 : index
    %c0_29 = arith.constant 0 : index
    %c2 = arith.constant 2 : index
    %c0_30 = arith.constant 0 : index
    %c0_31 = arith.constant 0 : index
    %32 = vector.load %arg5[%c0_28, %c0_29, %c2, %c0_30, %c0_31] : memref<1x1x4x90x4xbf16, #tpu.memory_space<vmem>>, vector<1x1x1x72x4xbf16>
    %33 = vector.shape_cast %32 : vector<1x1x1x72x4xbf16> to vector<72x4xbf16>
    %c9_i32_32 = arith.constant 9 : i32
    %34 = arith.muli %arg2, %c9_i32_32 : i32
    %c3_i32 = arith.constant 3 : i32
    %35 = arith.addi %34, %c3_i32 : i32
    %c0_i32_33 = arith.constant 0 : i32
    %36 = arith.addi %35, %c0_i32_33 : i32
    %37 = arith.index_cast %36 : i32 to index
    %c0_34 = arith.constant 0 : index
    %c0_35 = arith.constant 0 : index
    %38 = vector.load %arg3[%37, %c0_34, %c0_35] : memref<27x4x128xbf16, #tpu.memory_space<vmem>>, vector<1x4x128xbf16>
    %39 = vector.shape_cast %38 : vector<1x4x128xbf16> to vector<4x128xbf16>
    %cst_36 = arith.constant dense<0.000000e+00> : vector<72x128xf32>
    %40 = tpu.matmul %33, %39, %cst_36 {dimension_numbers = #tpu.dot_dimension_numbers<[1], [0], [0], [1], [0, 0, 1, 1], [], []>} : vector<72x4xbf16>, vector<4x128xbf16>, vector<72x128xf32> -> vector<72x128xf32>
    %41 = arith.addf %31, %40 : vector<72x128xf32>
    %c0_37 = arith.constant 0 : index
    %c0_38 = arith.constant 0 : index
    %c3 = arith.constant 3 : index
    %c0_39 = arith.constant 0 : index
    %c0_40 = arith.constant 0 : index
    %42 = vector.load %arg5[%c0_37, %c0_38, %c3, %c0_39, %c0_40] : memref<1x1x4x90x4xbf16, #tpu.memory_space<vmem>>, vector<1x1x1x72x4xbf16>
    %43 = vector.shape_cast %42 : vector<1x1x1x72x4xbf16> to vector<72x4xbf16>
    %c9_i32_41 = arith.constant 9 : i32
    %44 = arith.muli %arg2, %c9_i32_41 : i32
    %c3_i32_42 = arith.constant 3 : i32
    %45 = arith.addi %44, %c3_i32_42 : i32
    %c1_i32_43 = arith.constant 1 : i32
    %46 = arith.addi %45, %c1_i32_43 : i32
    %47 = arith.index_cast %46 : i32 to index
    %c0_44 = arith.constant 0 : index
    %c0_45 = arith.constant 0 : index
    %48 = vector.load %arg3[%47, %c0_44, %c0_45] : memref<27x4x128xbf16, #tpu.memory_space<vmem>>, vector<1x4x128xbf16>
    %49 = vector.shape_cast %48 : vector<1x4x128xbf16> to vector<4x128xbf16>
    %cst_46 = arith.constant dense<0.000000e+00> : vector<72x128xf32>
    %50 = tpu.matmul %43, %49, %cst_46 {dimension_numbers = #tpu.dot_dimension_numbers<[1], [0], [0], [1], [0, 0, 1, 1], [], []>} : vector<72x4xbf16>, vector<4x128xbf16>, vector<72x128xf32> -> vector<72x128xf32>
    %51 = arith.addf %41, %50 : vector<72x128xf32>
    %c0_47 = arith.constant 0 : index
    %c0_48 = arith.constant 0 : index
    %c2_49 = arith.constant 2 : index
    %c1_50 = arith.constant 1 : index
    %c0_51 = arith.constant 0 : index
    %52 = vector.load %arg5[%c0_47, %c0_48, %c2_49, %c1_50, %c0_51] : memref<1x1x4x90x4xbf16, #tpu.memory_space<vmem>>, vector<1x1x1x72x4xbf16>
    %53 = vector.shape_cast %52 : vector<1x1x1x72x4xbf16> to vector<72x4xbf16>
    %c9_i32_52 = arith.constant 9 : i32
    %54 = arith.muli %arg2, %c9_i32_52 : i32
    %c3_i32_53 = arith.constant 3 : i32
    %55 = arith.addi %54, %c3_i32_53 : i32
    %c2_i32_54 = arith.constant 2 : i32
    %56 = arith.addi %55, %c2_i32_54 : i32
    %57 = arith.index_cast %56 : i32 to index
    %c0_55 = arith.constant 0 : index
    %c0_56 = arith.constant 0 : index
    %58 = vector.load %arg3[%57, %c0_55, %c0_56] : memref<27x4x128xbf16, #tpu.memory_space<vmem>>, vector<1x4x128xbf16>
    %59 = vector.shape_cast %58 : vector<1x4x128xbf16> to vector<4x128xbf16>
    %cst_57 = arith.constant dense<0.000000e+00> : vector<72x128xf32>
    %60 = tpu.matmul %53, %59, %cst_57 {dimension_numbers = #tpu.dot_dimension_numbers<[1], [0], [0], [1], [0, 0, 1, 1], [], []>} : vector<72x4xbf16>, vector<4x128xbf16>, vector<72x128xf32> -> vector<72x128xf32>
    %61 = arith.addf %51, %60 : vector<72x128xf32>
    %c0_58 = arith.constant 0 : index
    %c0_59 = arith.constant 0 : index
    %c0_60 = arith.constant 0 : index
    %c9 = arith.constant 9 : index
    %c0_61 = arith.constant 0 : index
    %62 = vector.load %arg5[%c0_58, %c0_59, %c0_60, %c9, %c0_61] : memref<1x1x4x90x4xbf16, #tpu.memory_space<vmem>>, vector<1x1x1x72x4xbf16>
    %63 = vector.shape_cast %62 : vector<1x1x1x72x4xbf16> to vector<72x4xbf16>
    %c9_i32_62 = arith.constant 9 : i32
    %64 = arith.muli %arg2, %c9_i32_62 : i32
    %c6_i32 = arith.constant 6 : i32
    %65 = arith.addi %64, %c6_i32 : i32
    %c0_i32_63 = arith.constant 0 : i32
    %66 = arith.addi %65, %c0_i32_63 : i32
    %67 = arith.index_cast %66 : i32 to index
    %c0_64 = arith.constant 0 : index
    %c0_65 = arith.constant 0 : index
    %68 = vector.load %arg3[%67, %c0_64, %c0_65] : memref<27x4x128xbf16, #tpu.memory_space<vmem>>, vector<1x4x128xbf16>
    %69 = vector.shape_cast %68 : vector<1x4x128xbf16> to vector<4x128xbf16>
    %cst_66 = arith.constant dense<0.000000e+00> : vector<72x128xf32>
    %70 = tpu.matmul %63, %69, %cst_66 {dimension_numbers = #tpu.dot_dimension_numbers<[1], [0], [0], [1], [0, 0, 1, 1], [], []>} : vector<72x4xbf16>, vector<4x128xbf16>, vector<72x128xf32> -> vector<72x128xf32>
    %71 = arith.addf %61, %70 : vector<72x128xf32>
    %c0_67 = arith.constant 0 : index
    %c0_68 = arith.constant 0 : index
    %c1_69 = arith.constant 1 : index
    %c9_70 = arith.constant 9 : index
    %c0_71 = arith.constant 0 : index
    %72 = vector.load %arg5[%c0_67, %c0_68, %c1_69, %c9_70, %c0_71] : memref<1x1x4x90x4xbf16, #tpu.memory_space<vmem>>, vector<1x1x1x72x4xbf16>
    %73 = vector.shape_cast %72 : vector<1x1x1x72x4xbf16> to vector<72x4xbf16>
    %c9_i32_72 = arith.constant 9 : i32
    %74 = arith.muli %arg2, %c9_i32_72 : i32
    %c6_i32_73 = arith.constant 6 : i32
    %75 = arith.addi %74, %c6_i32_73 : i32
    %c1_i32_74 = arith.constant 1 : i32
    %76 = arith.addi %75, %c1_i32_74 : i32
    %77 = arith.index_cast %76 : i32 to index
    %c0_75 = arith.constant 0 : index
    %c0_76 = arith.constant 0 : index
    %78 = vector.load %arg3[%77, %c0_75, %c0_76] : memref<27x4x128xbf16, #tpu.memory_space<vmem>>, vector<1x4x128xbf16>
    %79 = vector.shape_cast %78 : vector<1x4x128xbf16> to vector<4x128xbf16>
    %cst_77 = arith.constant dense<0.000000e+00> : vector<72x128xf32>
    %80 = tpu.matmul %73, %79, %cst_77 {dimension_numbers = #tpu.dot_dimension_numbers<[1], [0], [0], [1], [0, 0, 1, 1], [], []>} : vector<72x4xbf16>, vector<4x128xbf16>, vector<72x128xf32> -> vector<72x128xf32>
    %81 = arith.addf %71, %80 : vector<72x128xf32>
    %c0_78 = arith.constant 0 : index
    %c0_79 = arith.constant 0 : index
    %c0_80 = arith.constant 0 : index
    %c10 = arith.constant 10 : index
    %c0_81 = arith.constant 0 : index
    %82 = vector.load %arg5[%c0_78, %c0_79, %c0_80, %c10, %c0_81] : memref<1x1x4x90x4xbf16, #tpu.memory_space<vmem>>, vector<1x1x1x72x4xbf16>
    %83 = vector.shape_cast %82 : vector<1x1x1x72x4xbf16> to vector<72x4xbf16>
    %c9_i32_82 = arith.constant 9 : i32
    %84 = arith.muli %arg2, %c9_i32_82 : i32
    %c6_i32_83 = arith.constant 6 : i32
    %85 = arith.addi %84, %c6_i32_83 : i32
    %c2_i32_84 = arith.constant 2 : i32
    %86 = arith.addi %85, %c2_i32_84 : i32
    %87 = arith.index_cast %86 : i32 to index
    %c0_85 = arith.constant 0 : index
    %c0_86 = arith.constant 0 : index
    %88 = vector.load %arg3[%87, %c0_85, %c0_86] : memref<27x4x128xbf16, #tpu.memory_space<vmem>>, vector<1x4x128xbf16>
    %89 = vector.shape_cast %88 : vector<1x4x128xbf16> to vector<4x128xbf16>
    %cst_87 = arith.constant dense<0.000000e+00> : vector<72x128xf32>
    %90 = tpu.matmul %83, %89, %cst_87 {dimension_numbers = #tpu.dot_dimension_numbers<[1], [0], [0], [1], [0, 0, 1, 1], [], []>} : vector<72x4xbf16>, vector<4x128xbf16>, vector<72x128xf32> -> vector<72x128xf32>
    %91 = arith.addf %81, %90 : vector<72x128xf32>
    %c0_88 = arith.constant 0 : index
    %c0_89 = arith.constant 0 : index
    %92 = vector.load %arg7[%c0_88, %c0_89] : memref<72x128xf32, #tpu.memory_space<vmem>>, vector<72x128xf32>
    %93 = arith.addf %92, %91 : vector<72x128xf32>
    %c0_90 = arith.constant 0 : index
    %c0_91 = arith.constant 0 : index
    %94 = vector.load %arg7[%c0_90, %c0_91] : memref<72x128xf32, #tpu.memory_space<vmem>>, vector<72x128xf32>
    tpu.vector_store %arg7[%c0_90, %c0_91], %93 {strides = array<i32>} : memref<72x128xf32, #tpu.memory_space<vmem>>, vector<72x128xf32>,
    %c2_i32_92 = arith.constant 2 : i32
    %95 = arith.cmpi eq, %arg2, %c2_i32_92 : i32
    %96 = arith.extui %95 : i1 to i32
    %c0_i32_93 = arith.constant 0 : i32
    %97 = arith.cmpi ne, %96, %c0_i32_93 : i32
    scf.if %97 {
      %c0_94 = arith.constant 0 : index
      %c0_95 = arith.constant 0 : index
      %98 = vector.load %arg7[%c0_94, %c0_95] : memref<72x128xf32, #tpu.memory_space<vmem>>, vector<72x128xf32>
      %99 = arith.truncf %98 : vector<72x128xf32> to vector<72x128xbf16>
      %c0_96 = arith.constant 0 : index
      %c0_97 = arith.constant 0 : index
      %c0_98 = arith.constant 0 : index
      %c0_99 = arith.constant 0 : index
      %100 = vector.load %arg6[%c0_96, %c0_97, %c0_98, %c0_99] : memref<1x1x72x128xbf16, #tpu.memory_space<vmem>>, vector<1x1x72x128xbf16>
      %101 = vector.shape_cast %100 : vector<1x1x72x128xbf16> to vector<72x128xbf16>
      %102 = vector.shape_cast %99 : vector<72x128xbf16> to vector<1x1x72x128xbf16>
      tpu.vector_store %arg6[%c0_96, %c0_97, %c0_98, %c0_99], %102 {strides = array<i32>} : memref<1x1x72x128xbf16, #tpu.memory_space<vmem>>, vector<1x1x72x128xbf16>,
    } else {
    }
    return
  }
  func.func @transform_0(%arg0: i32, %arg1: i32, %arg2: i32) -> (i32, i32, i32) {
    %c0_i32 = arith.constant 0 : i32
    %c0_i32_0 = arith.constant 0 : i32
    %c0_i32_1 = arith.constant 0 : i32
    %c0_i32_2 = arith.constant 0 : i32
    return %c0_i32, %c0_i32_0, %c0_i32_1 : i32, i32, i32
  }
  func.func @transform_1(%arg0: i32, %arg1: i32, %arg2: i32) -> (i32, i32) {
    %c0_i32 = arith.constant 0 : i32
    %c0_i32_0 = arith.constant 0 : i32
    %c0_i32_1 = arith.constant 0 : i32
    return %c0_i32, %c0_i32_0 : i32, i32
  }
  func.func @transform_2(%arg0: i32, %arg1: i32, %arg2: i32) -> (i32, i32, i32, i32, i32) {
    %c2_i32 = arith.constant 2 : i32
    %0 = arith.muli %c2_i32, %arg1 : i32
    %1 = arith.addi %0, %arg2 : i32
    %c0_i32 = arith.constant 0 : i32
    %c0_i32_0 = arith.constant 0 : i32
    %c0_i32_1 = arith.constant 0 : i32
    %c0_i32_2 = arith.constant 0 : i32
    return %arg0, %1, %c0_i32, %c0_i32_0, %c0_i32_1 : i32, i32, i32, i32, i32
  }
  func.func @transform_3(%arg0: i32, %arg1: i32, %arg2: i32) -> (i32, i32, i32, i32) {
    %c0_i32 = arith.constant 0 : i32
    %c0_i32_0 = arith.constant 0 : i32
    %c0_i32_1 = arith.constant 0 : i32
    return %arg0, %arg1, %c0_i32, %c0_i32_0 : i32, i32, i32, i32
  }
}

</mosaic_0001>

<llo_original>
// kernel: easyanimate_downsampler3d.1
$region0: #{easyanimate_downsampler3d.1}
  #allocation0 [shape = 'u32[]', space=smem, size = 0x4, offset = 0x4, fixed_abs, tag = 'smem constant byte address 0x4 - core index']
  #allocation1 [shape = 'u32[144,128]{1,0:T(1,128)}', space=vmem, size = 0x12000, scoped, tag = 'internal scratch']
  #allocation2 [shape = 'f32[72,128]{1,0:T(8,128)}', space=vmem, size = 0x9000, scoped, tag = 'scratch operand']
  %s0 = inlined_call_operand.vmem [shape: bf16[27,4,128], index: 0, kind: input, shape index: {}]
  %s1 = inlined_call_operand.vmem [shape: f32[1,128], index: 1, kind: input, shape index: {}]
  %s2 = inlined_call_operand.vmem [shape: bf16[2,10,4,90,4], index: 2, kind: input, shape index: {}]
  %s3 = inlined_call_operand.vmem [shape: bf16[2,4,72,128], index: 3, kind: output, shape index: {}]
  %s4 = sld [smem:[#allocation0]]
  $region53: #{easyanimate_downsampler3d.1} parent=0
    _
  %s6 = ssub.s32 1, %s4
  %s7 = scalar_select 0, %s6, %s4
  loop: start=0, step=1, limit=26
  $region2: #{easyanimate_downsampler3d.1} parent=0 // loop_pre_header
    _
  $region3: #{easyanimate_downsampler3d.1} parent=0 // loop_header
    %s9 = sphi 0, %s13
    %p10 = scmp.ge.s32.totalorder %s9, 26
    %s16 = sphi 0, %s35
    %s17 = sphi 0, %s31
    %s18 = sphi 0, %s27
    %s19 = sphi 0, %s16
    %s20 = sphi 0, %s17
    %s21 = sphi 0, %s18
    %s22 = sphi 0, %s19
    %s23 = sphi 0, %s20
    %s24 = sphi 0, %s21
    %s36 = sphi 0, %s36
    %s38 = sphi 0, %s36
    %s39 = sphi 0, %s38
    %s53 = sphi 0, %s39
    %s57 = sphi 0, %s57
    %s59 = sphi 0, %s57
    %s60 = sphi 0, %s59
    %s74 = sphi 0, %s60
    %s86 = sphi 0, %s88
    %s89 = sphi 0, %s86
    %s90 = sphi 0, %s89
    %s106 = sphi 0, %s90
    %s114 = sphi 0, %s116
    %s117 = sphi 0, %s114
    %s118 = sphi 0, %s117
    %s134 = sphi 0, %s118
  $region4: #{easyanimate_downsampler3d.1} parent=0 // loop_header_branch
    %12 = sbr.rel (%p10) target = $region8
  $region5: #{easyanimate_downsampler3d.1} parent=0 // loop_body
    %s14 = ssub.s32 %s9, 1
    %s15 = ssub.s32 %s9, 2
    %s25 = sadd.s32 1, %s18
    %p26 = scmp.ge.s32.totalorder %s25, 3
    %s27 = scalar_select %p26, 0, %s25
    %s28 = sadd.s32 1, %s17
    %s29 = scalar_select %p26, %s28, %s17
    %p30 = scmp.ge.s32.totalorder %s29, 4
    %s31 = scalar_select %p30, 0, %s29
    %s32 = sadd.s32 1, %s16
    %s33 = scalar_select %p30, %s32, %s16
    %p34 = scmp.ge.s32.totalorder %s33, 2
    %s35 = scalar_select %p34, 0, %s33
    %s37 = sadd.s32 %s36, 1
    %p40 = scmp.eq.s32.totalorder %s9, 23
    %p41 = scmp.ne.s32.totalorder %s36, %s38
    %p42 = scmp.eq.s32.totalorder %s9, 0
    %p43 = por %p41, %p42
    %p44 = scmp.ne.s32.totalorder %s36, %s38
    %p45 = scmp.eq.s32.totalorder %s14, 23
    %p46 = por %p44, %p45
    %p47 = scmp.ne.s32.totalorder %s38, %s39
    %p48 = scmp.eq.s32.totalorder %s14, 0
    %p49 = por %p47, %p48
    %p50 = scmp.ne.s32.totalorder %s38, %s39
    %p51 = scmp.eq.s32.totalorder %s15, 23
    %p52 = por %p50, %p51
    %p54 = scmp.ne.s32.totalorder %s39, %s53
    %p55 = scmp.eq.s32.totalorder %s15, 0
    %p56 = por %p54, %p55
    %s58 = sadd.s32 %s57, 1
    %p61 = scmp.eq.s32.totalorder %s9, 23
    %p62 = scmp.ne.s32.totalorder %s57, %s59
    %p63 = scmp.eq.s32.totalorder %s9, 0
    %p64 = por %p62, %p63
    %p65 = scmp.ne.s32.totalorder %s57, %s59
    %p66 = scmp.eq.s32.totalorder %s14, 23
    %p67 = por %p65, %p66
    %p68 = scmp.ne.s32.totalorder %s59, %s60
    %p69 = scmp.eq.s32.totalorder %s14, 0
    %p70 = por %p68, %p69
    %p71 = scmp.ne.s32.totalorder %s59, %s60
    %p72 = scmp.eq.s32.totalorder %s15, 23
    %p73 = por %p71, %p72
    %p75 = scmp.ne.s32.totalorder %s60, %s74
    %p76 = scmp.eq.s32.totalorder %s15, 0
    %p77 = por %p75, %p76
    %s78 = smul.u32 %s17, 2
    %s79 = sadd.s32 %s78, %s18
    %s80 = smul.u32 %s31, 2
    %s81 = sadd.s32 %s80, %s27
    %s82 = ssub.s32 %s16, %s35
    %s83 = ssub.s32 %s79, %s81
    %s84 = sor.u32 %s82, %s83
    %p85 = scmp.eq.s32.totalorder %s84, 0
    %s87 = sadd.s32 %s86, 1
    %s88 = scalar_select %p85, %s86, %s87
    %p91 = pneg %p85
    %p92 = scmp.eq.s32.totalorder %s9, 23
    %p93 = por %p91, %p92
    %p94 = scmp.ne.s32.totalorder %s86, %s89
    %p95 = scmp.eq.s32.totalorder %s9, 0
    %p96 = por %p94, %p95
    %p97 = scmp.ne.s32.totalorder %s86, %s89
    %p98 = scmp.eq.s32.totalorder %s14, 23
    %p99 = por %p97, %p98
    %p100 = scmp.ne.s32.totalorder %s89, %s90
    %p101 = scmp.eq.s32.totalorder %s14, 0
    %p102 = por %p100, %p101
    %p103 = scmp.ne.s32.totalorder %s89, %s90
    %p104 = scmp.eq.s32.totalorder %s15, 23
    %p105 = por %p103, %p104
    %p107 = scmp.ne.s32.totalorder %s90, %s106
    %p108 = scmp.eq.s32.totalorder %s15, 0
    %p109 = por %p107, %p108
    %s110 = ssub.s32 %s16, %s35
    %s111 = ssub.s32 %s17, %s31
    %s112 = sor.u32 %s110, %s111
    %p113 = scmp.eq.s32.totalorder %s112, 0
    %s115 = sadd.s32 %s114, 1
    %s116 = scalar_select %p113, %s114, %s115
    %p119 = pneg %p113
    %p120 = scmp.eq.s32.totalorder %s9, 23
    %p121 = por %p119, %p120
    %p122 = scmp.ne.s32.totalorder %s114, %s117
    %p123 = scmp.eq.s32.totalorder %s9, 0
    %p124 = por %p122, %p123
    %p125 = scmp.ne.s32.totalorder %s114, %s117
    %p126 = scmp.eq.s32.totalorder %s14, 23
    %p127 = por %p125, %p126
    %p128 = scmp.ne.s32.totalorder %s117, %s118
    %p129 = scmp.eq.s32.totalorder %s14, 0
    %p130 = por %p128, %p129
    %p131 = scmp.ne.s32.totalorder %s117, %s118
    %p132 = scmp.eq.s32.totalorder %s15, 23
    %p133 = por %p131, %p132
    %p135 = scmp.ne.s32.totalorder %s118, %s134
    %p136 = scmp.eq.s32.totalorder %s15, 0
    %p137 = por %p135, %p136
    %p138 = scmp.le.s32.totalorder 1, %s9
    %p139 = scmp.lt.s32.totalorder %s9, 25
    %p140 = pnand %p138, %p139
    %p141 = pneg %p140
    // Predicated region
    $region9: #{easyanimate_downsampler3d.1} parent=5 // pred_check
      _
    $region10: #{easyanimate_downsampler3d.1} parent=5 // pred_check_branch
      %143 = sbr.rel (%p140) target = $region12
    $region11: #{easyanimate_downsampler3d.1} parent=5 // pred_region
      %s144 = ssub.s32 %s9, 1
      // Predicated region
      $region13: #{easyanimate_downsampler3d.1} parent=11 // pred_check
        %p145 = pneg %p49
      $region14: #{easyanimate_downsampler3d.1} parent=11 // pred_check_branch
        %147 = sbr.rel (%p145) target = $region16
      $region15: #{easyanimate_downsampler3d.1} parent=11 // pred_region
        _
      $region16: #{easyanimate_downsampler3d.1} parent=11 // pred_fallthru
        _
      // Predicated region
      $region17: #{easyanimate_downsampler3d.1} parent=11 // pred_check
        %p148 = pneg %p70
      $region18: #{easyanimate_downsampler3d.1} parent=11 // pred_check_branch
        %150 = sbr.rel (%p148) target = $region20
      $region19: #{easyanimate_downsampler3d.1} parent=11 // pred_region
        _
      $region20: #{easyanimate_downsampler3d.1} parent=11 // pred_fallthru
        _
    $region12: #{easyanimate_downsampler3d.1} parent=5 // pred_fallthru
      _
    %p151 = scmp.lt.s32.totalorder %s9, 24
    // Predicated region
    $region21: #{easyanimate_downsampler3d.1} parent=5 // pred_check
      %p152 = pneg %p151
    $region22: #{easyanimate_downsampler3d.1} parent=5 // pred_check_branch
      %154 = sbr.rel (%p152) target = $region24
    $region23: #{easyanimate_downsampler3d.1} parent=5 // pred_region
      // Predicated region
      $region25: #{easyanimate_downsampler3d.1} parent=23 // pred_check
        %p155 = pneg %p96
      $region26: #{easyanimate_downsampler3d.1} parent=23 // pred_check_branch
        %157 = sbr.rel (%p155) target = $region28
      $region27: #{easyanimate_downsampler3d.1} parent=23 // pred_region
        %s158 = smul.u32 %s17, 2
        %s159 = sadd.s32 %s158, %s18
        %p160 = scmp.lt.s32.totalorder %s16, 1
        %s161 = scalar_select %p160, %s16, 1
        %p162 = scmp.lt.s32.totalorder %s159, 9
        %s163 = scalar_select %p162, %s159, 9
        %s164 = smul.addr %s163, 48
        %s165 = smul.addr %s161, 480
        %s166 = sadd.s32 %s164, %s165
        %s167 = smul.addr %s166, 4
        %s168 = scalar_lea.vmem %s2, %s167
        %s169 = smul.u32 %s17, 2
        %s170 = sadd.s32 %s169, %s18
      $region28: #{easyanimate_downsampler3d.1} parent=23 // pred_fallthru
        _
    $region24: #{easyanimate_downsampler3d.1} parent=5 // pred_fallthru
      _
    %p171 = scmp.le.s32.totalorder 1, %s9
    %p172 = scmp.lt.s32.totalorder %s9, 25
    %p173 = pnand %p171, %p172
    %p174 = pneg %p173
    // Predicated region
    $region29: #{easyanimate_downsampler3d.1} parent=5 // pred_check
      _
    $region30: #{easyanimate_downsampler3d.1} parent=5 // pred_check_branch
      %176 = sbr.rel (%p173) target = $region32
    $region31: #{easyanimate_downsampler3d.1} parent=5 // pred_region
      %s177 = ssub.s32 %s9, 1
      %p178 = pneg %p49
      %p179 = pneg %p46
      %p180 = pneg %p70
      %p181 = pneg %p67
      %s182 = smul.u32 %s20, 2
      %s183 = sadd.s32 %s182, %s21
      %p184 = scmp.lt.s32.totalorder %s19, 1
      %s185 = scalar_select %p184, %s19, 1
      %p186 = scmp.lt.s32.totalorder %s183, 9
      %s187 = scalar_select %p186, %s183, 9
      %s188 = smul.addr %s187, 48
      %s189 = smul.addr %s185, 480
      %s190 = sadd.s32 %s188, %s189
      %s191 = smul.addr %s190, 4
      %s192 = scalar_lea.vmem %s2, %s191
      %p193 = pneg %p102
      %p194 = pneg %p99
      %p195 = pneg %p130
      %p196 = pneg %p127
      %p197 = scmp.lt.s32.totalorder %s19, 1
      %s198 = scalar_select %p197, %s19, 1
      %p199 = scmp.lt.s32.totalorder %s20, 3
      %s200 = scalar_select %p199, %s20, 3
      %s201 = smul.addr %s200, 9
      %s202 = smul.addr %s198, 36
      %s203 = sadd.s32 %s201, %s202
      %s204 = smul.addr %s203, 4
      %s205 = scalar_lea.vmem %s3, %s204
      %s206 = smul.u32 %s20, 2
      %s207 = sadd.s32 %s206, %s21
      %p208 = scmp.lt.s32.totalorder %s19, 1
      %s209 = scalar_select %p208, %s19, 1
      %p210 = scmp.lt.s32.totalorder %s207, 9
      %s211 = scalar_select %p210, %s207, 9
      %s212 = smul.addr %s211, 48
      %s213 = smul.addr %s209, 480
      %s214 = sadd.s32 %s212, %s213
      %s215 = smul.addr %s214, 4
      %s216 = scalar_lea.vmem %s2, %s215
      %s217 = smul.u32 %s20, 2
      %s218 = sadd.s32 %s217, %s21
      %p219 = scmp.lt.s32.totalorder %s19, 1
      %s220 = scalar_select %p219, %s19, 1
      %p221 = scmp.lt.s32.totalorder %s20, 3
      %s222 = scalar_select %p221, %s20, 3
      %s223 = smul.addr %s222, 9
      %s224 = smul.addr %s220, 36
      %s225 = sadd.s32 %s223, %s224
      %s226 = smul.addr %s225, 4
      %s227 = scalar_lea.vmem %s3, %s226
      %p229 = scmp.eq.s32.totalorder %s21, 0
      // Predicated region
      $region33: #{easyanimate_downsampler3d.1} parent=31 // pred_check
        %p230 = pneg %p229
      $region34: #{easyanimate_downsampler3d.1} parent=31 // pred_check_branch
        %232 = sbr.rel (%p230) target = $region36
      $region35: #{easyanimate_downsampler3d.1} parent=31 // pred_region
        %v233 = vld [vmem:[%s1] sm:$0x1]
        %v235 = vlaneseq
        %v236 = vshrl.u32 %v235, 7
        %v237 = vsub.s32 0, %v236
        %v238 = vrot.slane %v233, %v237
        %240 = vst [vmem:[#allocation2] sm:$0xff] %v238
        %241 = vst [vmem:[#allocation2 + $0x8] sm:$0xff] %v238
        %242 = vst [vmem:[#allocation2 + $0x10] sm:$0xff] %v238
        %243 = vst [vmem:[#allocation2 + $0x18] sm:$0xff] %v238
        %244 = vst [vmem:[#allocation2 + $0x20] sm:$0xff] %v238
        %245 = vst [vmem:[#allocation2 + $0x28] sm:$0xff] %v238
        %246 = vst [vmem:[#allocation2 + $0x30] sm:$0xff] %v238
        %247 = vst [vmem:[#allocation2 + $0x38] sm:$0xff] %v238
        %248 = vst [vmem:[#allocation2 + $0x40] sm:$0xff] %v238
      $region36: #{easyanimate_downsampler3d.1} parent=31 // pred_fallthru
        _
      %v249 = vld [vmem:[%s216] sm:$0xf]
      %v250 = vld [vmem:[%s216 + $0x4] sm:$0xf]
      %v251 = vld [vmem:[%s216 + $0x8] sm:$0xf]
      %v252 = vld [vmem:[%s216 + $0xc] sm:$0xf]
      %v253 = vld [vmem:[%s216 + $0x10] sm:$0xf]
      %v254 = vld [vmem:[%s216 + $0x14] sm:$0xf]
      %v255 = vld [vmem:[%s216 + $0x18] sm:$0xf]
      %v256 = vld [vmem:[%s216 + $0x1c] sm:$0xf]
      %v257 = vld [vmem:[%s216 + $0x20] sm:$0xf]
      %s258 = smul.u32 %s21, 9
      %s259 = smul.addr %s258, 2
      %s260 = scalar_lea.vmem %s0, %s259
      %v261 = vld [vmem:[%s260] sm:$0x3]
      %s262 = scalar_lea.vmem %s216, 48
      %v263 = vld [vmem:[%s262] sm:$0xf]
      %v264 = vld [vmem:[%s262 + $0x4] sm:$0xf]
      %v265 = vld [vmem:[%s262 + $0x8] sm:$0xf]
      %v266 = vld [vmem:[%s262 + $0xc] sm:$0xf]
      %v267 = vld [vmem:[%s262 + $0x10] sm:$0xf]
      %v268 = vld [vmem:[%s262 + $0x14] sm:$0xf]
      %v269 = vld [vmem:[%s262 + $0x18] sm:$0xf]
      %v270 = vld [vmem:[%s262 + $0x1c] sm:$0xf]
      %v271 = vld [vmem:[%s262 + $0x20] sm:$0xf]
      %s272 = sadd.s32 %s258, 1
      %s273 = smul.addr %s272, 2
      %s274 = scalar_lea.vmem %s0, %s273
      %v275 = vld [vmem:[%s274] sm:$0x3]
      %v285 = vunpack.c.l.b16 %v263
      %v286 = vunpack.c.l.b16 %v264
      %v287 = vunpack.c.l.b16 %v265
      %v288 = vunpack.c.l.b16 %v266
      %v289 = vunpack.c.l.b16 %v267
      %v290 = vunpack.c.l.b16 %v268
      %v291 = vunpack.c.l.b16 %v269
      %v292 = vunpack.c.l.b16 %v270
      %v293 = vunpack.c.l.b16 %v271
      %v294 = vpack.c.b16 %v286, %v285
      %v295 = vpack.c.b16 %v288, %v287
      %v296 = vpack.c.b16 %v290, %v289
      %v297 = vpack.c.b16 %v292, %v291
      %v298 = vpack.c.b16 %v293, %v293
      %vm299 = vcmask 31744
      %v301 = vsel %vm299, %v294, 0
      %v304 = vsel %vm299, %v295, 0
      %v307 = vsel %vm299, %v296, 0
      %v310 = vsel %vm299, %v297, 0
      %v313 = vsel %vm299, %v298, 0
      %vm315 = vcmask 1041408
      %v317 = vsel %vm315, %v275, 0
      %319 = vmatprep.subr.bf16.mxu0 0
      %320 = vmatpush1.bf16.msra.mxu0 %v317
      %321 = vmatprep.subr.bf16.mxu0 0
      %322 = vmatpush1.bf16.msra.mxu0 0
      %323 = vmatprep.subr.bf16.mxu0 0
      %324 = vmatpush1.bf16.msra.mxu0 0
      %325 = vmatprep.subr.bf16.mxu0 0
      %326 = vmatpush1.bf16.msra.mxu0 0
      %327 = vmatprep.subr.bf16.mxu0 0
      %328 = vmatpush1.bf16.msra.mxu0 0
      %329 = vmatprep.subr.bf16.mxu0 0
      %330 = vmatpush1.bf16.msra.mxu0 0
      %331 = vmatprep.subr.bf16.mxu0 0
      %332 = vmatpush1.bf16.msra.mxu0 0
      %333 = vmatprep.subr.bf16.mxu0 0
      %334 = vmatpush1.bf16.msra.mxu0 0
      %335 = vmatprep.subr.bf16.mxu0 0
      %336 = vmatpush1.bf16.msra.mxu0 0
      %337 = vmatprep.subr.bf16.mxu0 0
      %338 = vmatpush1.bf16.msra.mxu0 0
      %339 = vmatprep.subr.bf16.mxu0 0
      %340 = vmatpush1.bf16.msra.mxu0 0
      %341 = vmatprep.subr.bf16.mxu0 0
      %342 = vmatpush1.bf16.msra.mxu0 0
      %343 = vmatprep.subr.bf16.mxu0 0
      %344 = vmatpush1.bf16.msra.mxu0 0
      %345 = vmatprep.subr.bf16.mxu0 0
      %346 = vmatpush1.bf16.msra.mxu0 0
      %347 = vmatprep.subr.bf16.mxu0 0
      %348 = vmatpush1.bf16.msra.mxu0 0
      %349 = vmatprep.subr.bf16.mxu0 0
      %350 = vmatpush1.bf16.msra.mxu0 0
      %351 = vmatprep.mubr.bf16.mxu0 0
      %352 = vmatmul.mubr.bf16.gmra.mrb[0].mxu0 %v301
      %v353 = vpop.f32.mrb[0].mxu0
      %v354 = vadd.f32 0.0, %v353
      %v355 = vpop.f32.mrb[0].mxu0
      %v356 = vpop.f32.mrb[0].mxu0
      %v357 = vadd.f32 0.0, %v356
      %v358 = vpop.f32.mrb[0].mxu0
      %359 = vmatprep.mubr.bf16.mxu0 0
      %360 = vmatmul.mubr.bf16.gmra.mrb[0].mxu0 %v304
      %v361 = vpop.f32.mrb[0].mxu0
      %v362 = vadd.f32 0.0, %v361
      %v363 = vpop.f32.mrb[0].mxu0
      %v364 = vpop.f32.mrb[0].mxu0
      %v365 = vadd.f32 0.0, %v364
      %v366 = vpop.f32.mrb[0].mxu0
      %367 = vmatprep.mubr.bf16.mxu0 0
      %368 = vmatmul.mubr.bf16.gmra.mrb[0].mxu0 %v307
      %v369 = vpop.f32.mrb[0].mxu0
      %v370 = vadd.f32 0.0, %v369
      %v371 = vpop.f32.mrb[0].mxu0
      %v372 = vpop.f32.mrb[0].mxu0
      %v373 = vadd.f32 0.0, %v372
      %v374 = vpop.f32.mrb[0].mxu0
      %375 = vmatprep.mubr.bf16.mxu0 0
      %376 = vmatmul.mubr.bf16.gmra.mrb[0].mxu0 %v310
      %v377 = vpop.f32.mrb[0].mxu0
      %v378 = vadd.f32 0.0, %v377
      %v379 = vpop.f32.mrb[0].mxu0
      %v380 = vpop.f32.mrb[0].mxu0
      %v381 = vadd.f32 0.0, %v380
      %v382 = vpop.f32.mrb[0].mxu0
      %383 = vmatprep.mubr.bf16.mxu0 0
      %384 = vmatmul.mubr.bf16.gmra.mrb[0].mxu0 %v313
      %v385 = vpop.f32.mrb[0].mxu0
      %v386 = vadd.f32 0.0, %v385
      %v387 = vpop.f32.mrb[0].mxu0
      %v388 = vpop.f32.mrb[0].mxu0
      %v389 = vpop.f32.mrb[0].mxu0
      %390 = vdwg.mxu0
      %v400 = vunpack.c.l.b16 %v249
      %v401 = vunpack.c.l.b16 %v250
      %v402 = vunpack.c.l.b16 %v251
      %v403 = vunpack.c.l.b16 %v252
      %v404 = vunpack.c.l.b16 %v253
      %v405 = vunpack.c.l.b16 %v254
      %v406 = vunpack.c.l.b16 %v255
      %v407 = vunpack.c.l.b16 %v256
      %v408 = vunpack.c.l.b16 %v257
      %v409 = vpack.c.b16 %v401, %v400
      %v410 = vpack.c.b16 %v403, %v402
      %v411 = vpack.c.b16 %v405, %v404
      %v412 = vpack.c.b16 %v407, %v406
      %v413 = vpack.c.b16 %v408, %v408
      %v415 = vsel %vm299, %v409, 0
      %v418 = vsel %vm299, %v410, 0
      %v421 = vsel %vm299, %v411, 0
      %v424 = vsel %vm299, %v412, 0
      %v427 = vsel %vm299, %v413, 0
      %v430 = vsel %vm315, %v261, 0
      %432 = vmatprep.subr.bf16.mxu0 0
      %433 = vmatpush1.bf16.msra.mxu0 %v430
      %434 = vmatprep.subr.bf16.mxu0 0
      %435 = vmatpush1.bf16.msra.mxu0 0
      %436 = vmatprep.subr.bf16.mxu0 0
      %437 = vmatpush1.bf16.msra.mxu0 0
      %438 = vmatprep.subr.bf16.mxu0 0
      %439 = vmatpush1.bf16.msra.mxu0 0
      %440 = vmatprep.subr.bf16.mxu0 0
      %441 = vmatpush1.bf16.msra.mxu0 0
      %442 = vmatprep.subr.bf16.mxu0 0
      %443 = vmatpush1.bf16.msra.mxu0 0
      %444 = vmatprep.subr.bf16.mxu0 0
      %445 = vmatpush1.bf16.msra.mxu0 0
      %446 = vmatprep.subr.bf16.mxu0 0
      %447 = vmatpush1.bf16.msra.mxu0 0
      %448 = vmatprep.subr.bf16.mxu0 0
      %449 = vmatpush1.bf16.msra.mxu0 0
      %450 = vmatprep.subr.bf16.mxu0 0
      %451 = vmatpush1.bf16.msra.mxu0 0
      %452 = vmatprep.subr.bf16.mxu0 0
      %453 = vmatpush1.bf16.msra.mxu0 0
      %454 = vmatprep.subr.bf16.mxu0 0
      %455 = vmatpush1.bf16.msra.mxu0 0
      %456 = vmatprep.subr.bf16.mxu0 0
      %457 = vmatpush1.bf16.msra.mxu0 0
      %458 = vmatprep.subr.bf16.mxu0 0
      %459 = vmatpush1.bf16.msra.mxu0 0
      %460 = vmatprep.subr.bf16.mxu0 0
      %461 = vmatpush1.bf16.msra.mxu0 0
      %462 = vmatprep.subr.bf16.mxu0 0
      %463 = vmatpush1.bf16.msra.mxu0 0
      %464 = vmatprep.mubr.bf16.mxu0 0
      %465 = vmatmul.mubr.bf16.gmra.mrb[0].mxu0 %v415
      %v466 = vpop.f32.mrb[0].mxu0
      %v467 = vadd.f32 %v354, %v466
      %v468 = vpop.f32.mrb[0].mxu0
      %v469 = vpop.f32.mrb[0].mxu0
      %v470 = vadd.f32 %v357, %v469
      %v471 = vpop.f32.mrb[0].mxu0
      %472 = vmatprep.mubr.bf16.mxu0 0
      %473 = vmatmul.mubr.bf16.gmra.mrb[0].mxu0 %v418
      %v474 = vpop.f32.mrb[0].mxu0
      %v475 = vadd.f32 %v362, %v474
      %v476 = vpop.f32.mrb[0].mxu0
      %v477 = vpop.f32.mrb[0].mxu0
      %v478 = vadd.f32 %v365, %v477
      %v479 = vpop.f32.mrb[0].mxu0
      %480 = vmatprep.mubr.bf16.mxu0 0
      %481 = vmatmul.mubr.bf16.gmra.mrb[0].mxu0 %v421
      %v482 = vpop.f32.mrb[0].mxu0
      %v483 = vadd.f32 %v370, %v482
      %v484 = vpop.f32.mrb[0].mxu0
      %v485 = vpop.f32.mrb[0].mxu0
      %v486 = vadd.f32 %v373, %v485
      %v487 = vpop.f32.mrb[0].mxu0
      %488 = vmatprep.mubr.bf16.mxu0 0
      %489 = vmatmul.mubr.bf16.gmra.mrb[0].mxu0 %v424
      %v490 = vpop.f32.mrb[0].mxu0
      %v491 = vadd.f32 %v378, %v490
      %v492 = vpop.f32.mrb[0].mxu0
      %v493 = vpop.f32.mrb[0].mxu0
      %v494 = vadd.f32 %v381, %v493
      %v495 = vpop.f32.mrb[0].mxu0
      %496 = vmatprep.mubr.bf16.mxu0 0
      %497 = vmatmul.mubr.bf16.gmra.mrb[0].mxu0 %v427
      %v498 = vpop.f32.mrb[0].mxu0
      %v499 = vadd.f32 %v386, %v498
      %v500 = vpop.f32.mrb[0].mxu0
      %v501 = vpop.f32.mrb[0].mxu0
      %v502 = vpop.f32.mrb[0].mxu0
      %503 = vdwg.mxu0
      %v504 = vld [vmem:[%s216] sm:$0xf]
      %v505 = vld [vmem:[%s216 + $0x4] sm:$0xf]
      %v506 = vld [vmem:[%s216 + $0x8] sm:$0xf]
      %v507 = vld [vmem:[%s216 + $0xc] sm:$0xf]
      %v508 = vld [vmem:[%s216 + $0x10] sm:$0xf]
      %v509 = vld [vmem:[%s216 + $0x14] sm:$0xf]
      %v510 = vld [vmem:[%s216 + $0x18] sm:$0xf]
      %v511 = vld [vmem:[%s216 + $0x1c] sm:$0xf]
      %v512 = vld [vmem:[%s216 + $0x20] sm:$0xf]
      %v513 = vld [vmem:[%s216 + $0x24] sm:$0x1]
      %s514 = sadd.s32 %s258, 2
      %s515 = smul.addr %s514, 2
      %s516 = scalar_lea.vmem %s0, %s515
      %v517 = vld [vmem:[%s516] sm:$0x3]
      %v528 = vunpack.c.l.b16 %v504
      %v529 = vunpack.c.l.b16 %v505
      %v530 = vunpack.c.l.b16 %v506
      %v531 = vunpack.c.l.b16 %v507
      %v532 = vunpack.c.l.b16 %v508
      %v533 = vunpack.c.l.b16 %v509
      %v534 = vunpack.c.l.b16 %v510
      %v535 = vunpack.c.l.b16 %v511
      %v536 = vunpack.c.l.b16 %v512
      %v537 = vunpack.c.l.b16 %v513
      %v538 = vpack.c.b16 %v529, %v528
      %v539 = vpack.c.b16 %v531, %v530
      %v540 = vpack.c.b16 %v533, %v532
      %v541 = vpack.c.b16 %v535, %v534
      %v542 = vpack.c.b16 %v537, %v536
      %vm543 = vsmask.f32 7424
      %v545 = vshrl.u32 %v538, 16
      %v547 = vshll.u32 %v538, 16
      %v549 = vrot.slane %v547, 1
      %v550 = vor.u32 %v545, %v549
      %v552 = vshll.u32 %v539, 16
      %v554 = vrot.slane %v552, 1
      %v555 = vsel %vm543, %v550, %v554
      %v556 = vshrl.u32 %v539, 16
      %v558 = vor.u32 %v556, %v554
      %v560 = vshll.u32 %v540, 16
      %v562 = vrot.slane %v560, 1
      %v563 = vsel %vm543, %v558, %v562
      %v564 = vshrl.u32 %v540, 16
      %v566 = vor.u32 %v564, %v562
      %v568 = vshll.u32 %v541, 16
      %v570 = vrot.slane %v568, 1
      %v571 = vsel %vm543, %v566, %v570
      %v572 = vshrl.u32 %v541, 16
      %v574 = vor.u32 %v572, %v570
      %v576 = vshll.u32 %v542, 16
      %v578 = vrot.slane %v576, 1
      %v579 = vsel %vm543, %v574, %v578
      %v580 = vshrl.u32 %v542, 16
      %v582 = vor.u32 %v580, %v578
      %v584 = vsel %vm299, %v555, 0
      %v587 = vsel %vm299, %v563, 0
      %v590 = vsel %vm299, %v571, 0
      %v593 = vsel %vm299, %v579, 0
      %v596 = vsel %vm299, %v582, 0
      %v599 = vsel %vm315, %v517, 0
      %601 = vmatprep.subr.bf16.mxu0 0
      %602 = vmatpush1.bf16.msra.mxu0 %v599
      %603 = vmatprep.subr.bf16.mxu0 0
      %604 = vmatpush1.bf16.msra.mxu0 0
      %605 = vmatprep.subr.bf16.mxu0 0
      %606 = vmatpush1.bf16.msra.mxu0 0
      %607 = vmatprep.subr.bf16.mxu0 0
      %608 = vmatpush1.bf16.msra.mxu0 0
      %609 = vmatprep.subr.bf16.mxu0 0
      %610 = vmatpush1.bf16.msra.mxu0 0
      %611 = vmatprep.subr.bf16.mxu0 0
      %612 = vmatpush1.bf16.msra.mxu0 0
      %613 = vmatprep.subr.bf16.mxu0 0
      %614 = vmatpush1.bf16.msra.mxu0 0
      %615 = vmatprep.subr.bf16.mxu0 0
      %616 = vmatpush1.bf16.msra.mxu0 0
      %617 = vmatprep.subr.bf16.mxu0 0
      %618 = vmatpush1.bf16.msra.mxu0 0
      %619 = vmatprep.subr.bf16.mxu0 0
      %620 = vmatpush1.bf16.msra.mxu0 0
      %621 = vmatprep.subr.bf16.mxu0 0
      %622 = vmatpush1.bf16.msra.mxu0 0
      %623 = vmatprep.subr.bf16.mxu0 0
      %624 = vmatpush1.bf16.msra.mxu0 0
      %625 = vmatprep.subr.bf16.mxu0 0
      %626 = vmatpush1.bf16.msra.mxu0 0
      %627 = vmatprep.subr.bf16.mxu0 0
      %628 = vmatpush1.bf16.msra.mxu0 0
      %629 = vmatprep.subr.bf16.mxu0 0
      %630 = vmatpush1.bf16.msra.mxu0 0
      %631 = vmatprep.subr.bf16.mxu0 0
      %632 = vmatpush1.bf16.msra.mxu0 0
      %633 = vmatprep.mubr.bf16.mxu0 0
      %634 = vmatmul.mubr.bf16.gmra.mrb[0].mxu0 %v584
      %v635 = vpop.f32.mrb[0].mxu0
      %v636 = vadd.f32 0.0, %v635
      %v637 = vpop.f32.mrb[0].mxu0
      %v638 = vpop.f32.mrb[0].mxu0
      %v639 = vadd.f32 0.0, %v638
      %v640 = vpop.f32.mrb[0].mxu0
      %641 = vmatprep.mubr.bf16.mxu0 0
      %642 = vmatmul.mubr.bf16.gmra.mrb[0].mxu0 %v587
      %v643 = vpop.f32.mrb[0].mxu0
      %v644 = vadd.f32 0.0, %v643
      %v645 = vpop.f32.mrb[0].mxu0
      %v646 = vpop.f32.mrb[0].mxu0
      %v647 = vadd.f32 0.0, %v646
      %v648 = vpop.f32.mrb[0].mxu0
      %649 = vmatprep.mubr.bf16.mxu0 0
      %650 = vmatmul.mubr.bf16.gmra.mrb[0].mxu0 %v590
      %v651 = vpop.f32.mrb[0].mxu0
      %v652 = vadd.f32 0.0, %v651
      %v653 = vpop.f32.mrb[0].mxu0
      %v654 = vpop.f32.mrb[0].mxu0
      %v655 = vadd.f32 0.0, %v654
      %v656 = vpop.f32.mrb[0].mxu0
      %657 = vmatprep.mubr.bf16.mxu0 0
      %658 = vmatmul.mubr.bf16.gmra.mrb[0].mxu0 %v593
      %v659 = vpop.f32.mrb[0].mxu0
      %v660 = vadd.f32 0.0, %v659
      %v661 = vpop.f32.mrb[0].mxu0
      %v662 = vpop.f32.mrb[0].mxu0
      %v663 = vadd.f32 0.0, %v662
      %v664 = vpop.f32.mrb[0].mxu0
      %665 = vmatprep.mubr.bf16.mxu0 0
      %666 = vmatmul.mubr.bf16.gmra.mrb[0].mxu0 %v596
      %v667 = vpop.f32.mrb[0].mxu0
      %v668 = vadd.f32 0.0, %v667
      %v669 = vpop.f32.mrb[0].mxu0
      %v670 = vpop.f32.mrb[0].mxu0
      %v671 = vpop.f32.mrb[0].mxu0
      %672 = vdwg.mxu0
      %v673 = vadd.f32 %v467, %v636
      %v674 = vadd.f32 %v470, %v639
      %v675 = vadd.f32 %v475, %v644
      %v676 = vadd.f32 %v478, %v647
      %v677 = vadd.f32 %v483, %v652
      %v678 = vadd.f32 %v486, %v655
      %v679 = vadd.f32 %v491, %v660
      %v680 = vadd.f32 %v494, %v663
      %v681 = vadd.f32 %v499, %v668
      %s682 = scalar_lea.vmem %s216, 96
      %v683 = vld [vmem:[%s682] sm:$0xf]
      %v684 = vld [vmem:[%s682 + $0x4] sm:$0xf]
      %v685 = vld [vmem:[%s682 + $0x8] sm:$0xf]
      %v686 = vld [vmem:[%s682 + $0xc] sm:$0xf]
      %v687 = vld [vmem:[%s682 + $0x10] sm:$0xf]
      %v688 = vld [vmem:[%s682 + $0x14] sm:$0xf]
      %v689 = vld [vmem:[%s682 + $0x18] sm:$0xf]
      %v690 = vld [vmem:[%s682 + $0x1c] sm:$0xf]
      %v691 = vld [vmem:[%s682 + $0x20] sm:$0xf]
      %s692 = sadd.s32 %s258, 3
      %s693 = smul.addr %s692, 2
      %s694 = scalar_lea.vmem %s0, %s693
      %v695 = vld [vmem:[%s694] sm:$0x3]
      %v705 = vunpack.c.l.b16 %v683
      %v706 = vunpack.c.l.b16 %v684
      %v707 = vunpack.c.l.b16 %v685
      %v708 = vunpack.c.l.b16 %v686
      %v709 = vunpack.c.l.b16 %v687
      %v710 = vunpack.c.l.b16 %v688
      %v711 = vunpack.c.l.b16 %v689
      %v712 = vunpack.c.l.b16 %v690
      %v713 = vunpack.c.l.b16 %v691
      %v714 = vpack.c.b16 %v706, %v705
      %v715 = vpack.c.b16 %v708, %v707
      %v716 = vpack.c.b16 %v710, %v709
      %v717 = vpack.c.b16 %v712, %v711
      %v718 = vpack.c.b16 %v713, %v713
      %v720 = vsel %vm299, %v714, 0
      %v723 = vsel %vm299, %v715, 0
      %v726 = vsel %vm299, %v716, 0
      %v729 = vsel %vm299, %v717, 0
      %v732 = vsel %vm299, %v718, 0
      %v735 = vsel %vm315, %v695, 0
      %737 = vmatprep.subr.bf16.mxu0 0
      %738 = vmatpush1.bf16.msra.mxu0 %v735
      %739 = vmatprep.subr.bf16.mxu0 0
      %740 = vmatpush1.bf16.msra.mxu0 0
      %741 = vmatprep.subr.bf16.mxu0 0
      %742 = vmatpush1.bf16.msra.mxu0 0
      %743 = vmatprep.subr.bf16.mxu0 0
      %744 = vmatpush1.bf16.msra.mxu0 0
      %745 = vmatprep.subr.bf16.mxu0 0
      %746 = vmatpush1.bf16.msra.mxu0 0
      %747 = vmatprep.subr.bf16.mxu0 0
      %748 = vmatpush1.bf16.msra.mxu0 0
      %749 = vmatprep.subr.bf16.mxu0 0
      %750 = vmatpush1.bf16.msra.mxu0 0
      %751 = vmatprep.subr.bf16.mxu0 0
      %752 = vmatpush1.bf16.msra.mxu0 0
      %753 = vmatprep.subr.bf16.mxu0 0
      %754 = vmatpush1.bf16.msra.mxu0 0
      %755 = vmatprep.subr.bf16.mxu0 0
      %756 = vmatpush1.bf16.msra.mxu0 0
      %757 = vmatprep.subr.bf16.mxu0 0
      %758 = vmatpush1.bf16.msra.mxu0 0
      %759 = vmatprep.subr.bf16.mxu0 0
      %760 = vmatpush1.bf16.msra.mxu0 0
      %761 = vmatprep.subr.bf16.mxu0 0
      %762 = vmatpush1.bf16.msra.mxu0 0
      %763 = vmatprep.subr.bf16.mxu0 0
      %764 = vmatpush1.bf16.msra.mxu0 0
      %765 = vmatprep.subr.bf16.mxu0 0
      %766 = vmatpush1.bf16.msra.mxu0 0
      %767 = vmatprep.subr.bf16.mxu0 0
      %768 = vmatpush1.bf16.msra.mxu0 0
      %769 = vmatprep.mubr.bf16.mxu0 0
      %770 = vmatmul.mubr.bf16.gmra.mrb[0].mxu0 %v720
      %v771 = vpop.f32.mrb[0].mxu0
      %v772 = vadd.f32 0.0, %v771
      %v773 = vpop.f32.mrb[0].mxu0
      %v774 = vpop.f32.mrb[0].mxu0
      %v775 = vadd.f32 0.0, %v774
      %v776 = vpop.f32.mrb[0].mxu0
      %777 = vmatprep.mubr.bf16.mxu0 0
      %778 = vmatmul.mubr.bf16.gmra.mrb[0].mxu0 %v723
      %v779 = vpop.f32.mrb[0].mxu0
      %v780 = vadd.f32 0.0, %v779
      %v781 = vpop.f32.mrb[0].mxu0
      %v782 = vpop.f32.mrb[0].mxu0
      %v783 = vadd.f32 0.0, %v782
      %v784 = vpop.f32.mrb[0].mxu0
      %785 = vmatprep.mubr.bf16.mxu0 0
      %786 = vmatmul.mubr.bf16.gmra.mrb[0].mxu0 %v726
      %v787 = vpop.f32.mrb[0].mxu0
      %v788 = vadd.f32 0.0, %v787
      %v789 = vpop.f32.mrb[0].mxu0
      %v790 = vpop.f32.mrb[0].mxu0
      %v791 = vadd.f32 0.0, %v790
      %v792 = vpop.f32.mrb[0].mxu0
      %793 = vmatprep.mubr.bf16.mxu0 0
      %794 = vmatmul.mubr.bf16.gmra.mrb[0].mxu0 %v729
      %v795 = vpop.f32.mrb[0].mxu0
      %v796 = vadd.f32 0.0, %v795
      %v797 = vpop.f32.mrb[0].mxu0
      %v798 = vpop.f32.mrb[0].mxu0
      %v799 = vadd.f32 0.0, %v798
      %v800 = vpop.f32.mrb[0].mxu0
      %801 = vmatprep.mubr.bf16.mxu0 0
      %802 = vmatmul.mubr.bf16.gmra.mrb[0].mxu0 %v732
      %v803 = vpop.f32.mrb[0].mxu0
      %v804 = vadd.f32 0.0, %v803
      %v805 = vpop.f32.mrb[0].mxu0
      %v806 = vpop.f32.mrb[0].mxu0
      %v807 = vpop.f32.mrb[0].mxu0
      %808 = vdwg.mxu0
      %v809 = vadd.f32 %v673, %v772
      %v810 = vadd.f32 %v674, %v775
      %v811 = vadd.f32 %v675, %v780
      %v812 = vadd.f32 %v676, %v783
      %v813 = vadd.f32 %v677, %v788
      %v814 = vadd.f32 %v678, %v791
      %v815 = vadd.f32 %v679, %v796
      %v816 = vadd.f32 %v680, %v799
      %v817 = vadd.f32 %v681, %v804
      %s818 = scalar_lea.vmem %s216, 144
      %v819 = vld [vmem:[%s818] sm:$0xf]
      %v820 = vld [vmem:[%s818 + $0x4] sm:$0xf]
      %v821 = vld [vmem:[%s818 + $0x8] sm:$0xf]
      %v822 = vld [vmem:[%s818 + $0xc] sm:$0xf]
      %v823 = vld [vmem:[%s818 + $0x10] sm:$0xf]
      %v824 = vld [vmem:[%s818 + $0x14] sm:$0xf]
      %v825 = vld [vmem:[%s818 + $0x18] sm:$0xf]
      %v826 = vld [vmem:[%s818 + $0x1c] sm:$0xf]
      %v827 = vld [vmem:[%s818 + $0x20] sm:$0xf]
      %s828 = sadd.s32 %s258, 4
      %s829 = smul.addr %s828, 2
      %s830 = scalar_lea.vmem %s0, %s829
      %v831 = vld [vmem:[%s830] sm:$0x3]
      %v841 = vunpack.c.l.b16 %v819
      %v842 = vunpack.c.l.b16 %v820
      %v843 = vunpack.c.l.b16 %v821
      %v844 = vunpack.c.l.b16 %v822
      %v845 = vunpack.c.l.b16 %v823
      %v846 = vunpack.c.l.b16 %v824
      %v847 = vunpack.c.l.b16 %v825
      %v848 = vunpack.c.l.b16 %v826
      %v849 = vunpack.c.l.b16 %v827
      %v850 = vpack.c.b16 %v842, %v841
      %v851 = vpack.c.b16 %v844, %v843
      %v852 = vpack.c.b16 %v846, %v845
      %v853 = vpack.c.b16 %v848, %v847
      %v854 = vpack.c.b16 %v849, %v849
      %v856 = vsel %vm299, %v850, 0
      %v859 = vsel %vm299, %v851, 0
      %v862 = vsel %vm299, %v852, 0
      %v865 = vsel %vm299, %v853, 0
      %v868 = vsel %vm299, %v854, 0
      %v871 = vsel %vm315, %v831, 0
      %873 = vmatprep.subr.bf16.mxu0 0
      %874 = vmatpush1.bf16.msra.mxu0 %v871
      %875 = vmatprep.subr.bf16.mxu0 0
      %876 = vmatpush1.bf16.msra.mxu0 0
      %877 = vmatprep.subr.bf16.mxu0 0
      %878 = vmatpush1.bf16.msra.mxu0 0
      %879 = vmatprep.subr.bf16.mxu0 0
      %880 = vmatpush1.bf16.msra.mxu0 0
      %881 = vmatprep.subr.bf16.mxu0 0
      %882 = vmatpush1.bf16.msra.mxu0 0
      %883 = vmatprep.subr.bf16.mxu0 0
      %884 = vmatpush1.bf16.msra.mxu0 0
      %885 = vmatprep.subr.bf16.mxu0 0
      %886 = vmatpush1.bf16.msra.mxu0 0
      %887 = vmatprep.subr.bf16.mxu0 0
      %888 = vmatpush1.bf16.msra.mxu0 0
      %889 = vmatprep.subr.bf16.mxu0 0
      %890 = vmatpush1.bf16.msra.mxu0 0
      %891 = vmatprep.subr.bf16.mxu0 0
      %892 = vmatpush1.bf16.msra.mxu0 0
      %893 = vmatprep.subr.bf16.mxu0 0
      %894 = vmatpush1.bf16.msra.mxu0 0
      %895 = vmatprep.subr.bf16.mxu0 0
      %896 = vmatpush1.bf16.msra.mxu0 0
      %897 = vmatprep.subr.bf16.mxu0 0
      %898 = vmatpush1.bf16.msra.mxu0 0
      %899 = vmatprep.subr.bf16.mxu0 0
      %900 = vmatpush1.bf16.msra.mxu0 0
      %901 = vmatprep.subr.bf16.mxu0 0
      %902 = vmatpush1.bf16.msra.mxu0 0
      %903 = vmatprep.subr.bf16.mxu0 0
      %904 = vmatpush1.bf16.msra.mxu0 0
      %905 = vmatprep.mubr.bf16.mxu0 0
      %906 = vmatmul.mubr.bf16.gmra.mrb[0].mxu0 %v856
      %v907 = vpop.f32.mrb[0].mxu0
      %v908 = vadd.f32 0.0, %v907
      %v909 = vpop.f32.mrb[0].mxu0
      %v910 = vpop.f32.mrb[0].mxu0
      %v911 = vadd.f32 0.0, %v910
      %v912 = vpop.f32.mrb[0].mxu0
      %913 = vmatprep.mubr.bf16.mxu0 0
      %914 = vmatmul.mubr.bf16.gmra.mrb[0].mxu0 %v859
      %v915 = vpop.f32.mrb[0].mxu0
      %v916 = vadd.f32 0.0, %v915
      %v917 = vpop.f32.mrb[0].mxu0
      %v918 = vpop.f32.mrb[0].mxu0
      %v919 = vadd.f32 0.0, %v918
      %v920 = vpop.f32.mrb[0].mxu0
      %921 = vmatprep.mubr.bf16.mxu0 0
      %922 = vmatmul.mubr.bf16.gmra.mrb[0].mxu0 %v862
      %v923 = vpop.f32.mrb[0].mxu0
      %v924 = vadd.f32 0.0, %v923
      %v925 = vpop.f32.mrb[0].mxu0
      %v926 = vpop.f32.mrb[0].mxu0
      %v927 = vadd.f32 0.0, %v926
      %v928 = vpop.f32.mrb[0].mxu0
      %929 = vmatprep.mubr.bf16.mxu0 0
      %930 = vmatmul.mubr.bf16.gmra.mrb[0].mxu0 %v865
      %v931 = vpop.f32.mrb[0].mxu0
      %v932 = vadd.f32 0.0, %v931
      %v933 = vpop.f32.mrb[0].mxu0
      %v934 = vpop.f32.mrb[0].mxu0
      %v935 = vadd.f32 0.0, %v934
      %v936 = vpop.f32.mrb[0].mxu0
      %937 = vmatprep.mubr.bf16.mxu0 0
      %938 = vmatmul.mubr.bf16.gmra.mrb[0].mxu0 %v868
      %v939 = vpop.f32.mrb[0].mxu0
      %v940 = vadd.f32 0.0, %v939
      %v941 = vpop.f32.mrb[0].mxu0
      %v942 = vpop.f32.mrb[0].mxu0
      %v943 = vpop.f32.mrb[0].mxu0
      %944 = vdwg.mxu0
      %v945 = vadd.f32 %v809, %v908
      %v946 = vadd.f32 %v810, %v911
      %v947 = vadd.f32 %v811, %v916
      %v948 = vadd.f32 %v812, %v919
      %v949 = vadd.f32 %v813, %v924
      %v950 = vadd.f32 %v814, %v927
      %v951 = vadd.f32 %v815, %v932
      %v952 = vadd.f32 %v816, %v935
      %v953 = vadd.f32 %v817, %v940
      %v954 = vld [vmem:[%s682] sm:$0xf]
      %v955 = vld [vmem:[%s682 + $0x4] sm:$0xf]
      %v956 = vld [vmem:[%s682 + $0x8] sm:$0xf]
      %v957 = vld [vmem:[%s682 + $0xc] sm:$0xf]
      %v958 = vld [vmem:[%s682 + $0x10] sm:$0xf]
      %v959 = vld [vmem:[%s682 + $0x14] sm:$0xf]
      %v960 = vld [vmem:[%s682 + $0x18] sm:$0xf]
      %v961 = vld [vmem:[%s682 + $0x1c] sm:$0xf]
      %v962 = vld [vmem:[%s682 + $0x20] sm:$0xf]
      %v963 = vld [vmem:[%s682 + $0x24] sm:$0x1]
      %s964 = sadd.s32 %s258, 5
      %s965 = smul.addr %s964, 2
      %s966 = scalar_lea.vmem %s0, %s965
      %v967 = vld [vmem:[%s966] sm:$0x3]
      %v978 = vunpack.c.l.b16 %v954
      %v979 = vunpack.c.l.b16 %v955
      %v980 = vunpack.c.l.b16 %v956
      %v981 = vunpack.c.l.b16 %v957
      %v982 = vunpack.c.l.b16 %v958
      %v983 = vunpack.c.l.b16 %v959
      %v984 = vunpack.c.l.b16 %v960
      %v985 = vunpack.c.l.b16 %v961
      %v986 = vunpack.c.l.b16 %v962
      %v987 = vunpack.c.l.b16 %v963
      %v988 = vpack.c.b16 %v979, %v978
      %v989 = vpack.c.b16 %v981, %v980
      %v990 = vpack.c.b16 %v983, %v982
      %v991 = vpack.c.b16 %v985, %v984
      %v992 = vpack.c.b16 %v987, %v986
      %v994 = vshrl.u32 %v988, 16
      %v996 = vshll.u32 %v988, 16
      %v998 = vrot.slane %v996, 1
      %v999 = vor.u32 %v994, %v998
      %v1001 = vshll.u32 %v989, 16
      %v1003 = vrot.slane %v1001, 1
      %v1004 = vsel %vm543, %v999, %v1003
      %v1005 = vshrl.u32 %v989, 16
      %v1007 = vor.u32 %v1005, %v1003
      %v1009 = vshll.u32 %v990, 16
      %v1011 = vrot.slane %v1009, 1
      %v1012 = vsel %vm543, %v1007, %v1011
      %v1013 = vshrl.u32 %v990, 16
      %v1015 = vor.u32 %v1013, %v1011
      %v1017 = vshll.u32 %v991, 16
      %v1019 = vrot.slane %v1017, 1
      %v1020 = vsel %vm543, %v1015, %v1019
      %v1021 = vshrl.u32 %v991, 16
      %v1023 = vor.u32 %v1021, %v1019
      %v1025 = vshll.u32 %v992, 16
      %v1027 = vrot.slane %v1025, 1
      %v1028 = vsel %vm543, %v1023, %v1027
      %v1029 = vshrl.u32 %v992, 16
      %v1031 = vor.u32 %v1029, %v1027
      %v1033 = vsel %vm299, %v1004, 0
      %v1036 = vsel %vm299, %v1012, 0
      %v1039 = vsel %vm299, %v1020, 0
      %v1042 = vsel %vm299, %v1028, 0
      %v1045 = vsel %vm299, %v1031, 0
      %v1048 = vsel %vm315, %v967, 0
      %1050 = vmatprep.subr.bf16.mxu0 0
      %1051 = vmatpush1.bf16.msra.mxu0 %v1048
      %1052 = vmatprep.subr.bf16.mxu0 0
      %1053 = vmatpush1.bf16.msra.mxu0 0
      %1054 = vmatprep.subr.bf16.mxu0 0
      %1055 = vmatpush1.bf16.msra.mxu0 0
      %1056 = vmatprep.subr.bf16.mxu0 0
      %1057 = vmatpush1.bf16.msra.mxu0 0
      %1058 = vmatprep.subr.bf16.mxu0 0
      %1059 = vmatpush1.bf16.msra.mxu0 0
      %1060 = vmatprep.subr.bf16.mxu0 0
      %1061 = vmatpush1.bf16.msra.mxu0 0
      %1062 = vmatprep.subr.bf16.mxu0 0
      %1063 = vmatpush1.bf16.msra.mxu0 0
      %1064 = vmatprep.subr.bf16.mxu0 0
      %1065 = vmatpush1.bf16.msra.mxu0 0
      %1066 = vmatprep.subr.bf16.mxu0 0
      %1067 = vmatpush1.bf16.msra.mxu0 0
      %1068 = vmatprep.subr.bf16.mxu0 0
      %1069 = vmatpush1.bf16.msra.mxu0 0
      %1070 = vmatprep.subr.bf16.mxu0 0
      %1071 = vmatpush1.bf16.msra.mxu0 0
      %1072 = vmatprep.subr.bf16.mxu0 0
      %1073 = vmatpush1.bf16.msra.mxu0 0
      %1074 = vmatprep.subr.bf16.mxu0 0
      %1075 = vmatpush1.bf16.msra.mxu0 0
      %1076 = vmatprep.subr.bf16.mxu0 0
      %1077 = vmatpush1.bf16.msra.mxu0 0
      %1078 = vmatprep.subr.bf16.mxu0 0
      %1079 = vmatpush1.bf16.msra.mxu0 0
      %1080 = vmatprep.subr.bf16.mxu0 0
      %1081 = vmatpush1.bf16.msra.mxu0 0
      %1082 = vmatprep.mubr.bf16.mxu0 0
      %1083 = vmatmul.mubr.bf16.gmra.mrb[0].mxu0 %v1033
      %v1084 = vpop.f32.mrb[0].mxu0
      %v1085 = vadd.f32 0.0, %v1084
      %v1086 = vpop.f32.mrb[0].mxu0
      %v1087 = vpop.f32.mrb[0].mxu0
      %v1088 = vadd.f32 0.0, %v1087
      %v1089 = vpop.f32.mrb[0].mxu0
      %1090 = vmatprep.mubr.bf16.mxu0 0
      %1091 = vmatmul.mubr.bf16.gmra.mrb[0].mxu0 %v1036
      %v1092 = vpop.f32.mrb[0].mxu0
      %v1093 = vadd.f32 0.0, %v1092
      %v1094 = vpop.f32.mrb[0].mxu0
      %v1095 = vpop.f32.mrb[0].mxu0
      %v1096 = vadd.f32 0.0, %v1095
      %v1097 = vpop.f32.mrb[0].mxu0
      %1098 = vmatprep.mubr.bf16.mxu0 0
      %1099 = vmatmul.mubr.bf16.gmra.mrb[0].mxu0 %v1039
      %v1100 = vpop.f32.mrb[0].mxu0
      %v1101 = vadd.f32 0.0, %v1100
      %v1102 = vpop.f32.mrb[0].mxu0
      %v1103 = vpop.f32.mrb[0].mxu0
      %v1104 = vadd.f32 0.0, %v1103
      %v1105 = vpop.f32.mrb[0].mxu0
      %1106 = vmatprep.mubr.bf16.mxu0 0
      %1107 = vmatmul.mubr.bf16.gmra.mrb[0].mxu0 %v1042
      %v1108 = vpop.f32.mrb[0].mxu0
      %v1109 = vadd.f32 0.0, %v1108
      %v1110 = vpop.f32.mrb[0].mxu0
      %v1111 = vpop.f32.mrb[0].mxu0
      %v1112 = vadd.f32 0.0, %v1111
      %v1113 = vpop.f32.mrb[0].mxu0
      %1114 = vmatprep.mubr.bf16.mxu0 0
      %1115 = vmatmul.mubr.bf16.gmra.mrb[0].mxu0 %v1045
      %v1116 = vpop.f32.mrb[0].mxu0
      %v1117 = vadd.f32 0.0, %v1116
      %v1118 = vpop.f32.mrb[0].mxu0
      %v1119 = vpop.f32.mrb[0].mxu0
      %v1120 = vpop.f32.mrb[0].mxu0
      %1121 = vdwg.mxu0
      %v1122 = vadd.f32 %v945, %v1085
      %v1123 = vadd.f32 %v946, %v1088
      %v1124 = vadd.f32 %v947, %v1093
      %v1125 = vadd.f32 %v948, %v1096
      %v1126 = vadd.f32 %v949, %v1101
      %v1127 = vadd.f32 %v950, %v1104
      %v1128 = vadd.f32 %v951, %v1109
      %v1129 = vadd.f32 %v952, %v1112
      %v1130 = vadd.f32 %v953, %v1117
      %v1131 = vld [vmem:[%s216 + $0x4] sm:$0xf]
      %v1132 = vld [vmem:[%s216 + $0x8] sm:$0xf]
      %v1133 = vld [vmem:[%s216 + $0xc] sm:$0xf]
      %v1134 = vld [vmem:[%s216 + $0x10] sm:$0xf]
      %v1135 = vld [vmem:[%s216 + $0x14] sm:$0xf]
      %v1136 = vld [vmem:[%s216 + $0x18] sm:$0xf]
      %v1137 = vld [vmem:[%s216 + $0x1c] sm:$0xf]
      %v1138 = vld [vmem:[%s216 + $0x20] sm:$0xf]
      %v1139 = vld [vmem:[%s216 + $0x24] sm:$0xf]
      %v1140 = vld [vmem:[%s216 + $0x28] sm:$0x1]
      %s1141 = sadd.s32 %s258, 6
      %s1142 = smul.addr %s1141, 2
      %s1143 = scalar_lea.vmem %s0, %s1142
      %v1144 = vld [vmem:[%s1143] sm:$0x3]
      %v1155 = vunpack.c.l.b16 %v1131
      %v1156 = vunpack.c.l.b16 %v1132
      %v1157 = vunpack.c.l.b16 %v1133
      %v1158 = vunpack.c.l.b16 %v1134
      %v1159 = vunpack.c.l.b16 %v1135
      %v1160 = vunpack.c.l.b16 %v1136
      %v1161 = vunpack.c.l.b16 %v1137
      %v1162 = vunpack.c.l.b16 %v1138
      %v1163 = vunpack.c.l.b16 %v1139
      %v1164 = vunpack.c.l.b16 %v1140
      %v1165 = vpack.c.b16 %v1156, %v1155
      %v1166 = vpack.c.b16 %v1158, %v1157
      %v1167 = vpack.c.b16 %v1160, %v1159
      %v1168 = vpack.c.b16 %v1162, %v1161
      %v1169 = vpack.c.b16 %v1164, %v1163
      %v1171 = vshrl.u32 %v1165, 16
      %v1173 = vshll.u32 %v1165, 16
      %v1175 = vrot.slane %v1173, 1
      %v1176 = vor.u32 %v1171, %v1175
      %v1178 = vshll.u32 %v1166, 16
      %v1180 = vrot.slane %v1178, 1
      %v1181 = vsel %vm543, %v1176, %v1180
      %v1182 = vshrl.u32 %v1166, 16
      %v1184 = vor.u32 %v1182, %v1180
      %v1186 = vshll.u32 %v1167, 16
      %v1188 = vrot.slane %v1186, 1
      %v1189 = vsel %vm543, %v1184, %v1188
      %v1190 = vshrl.u32 %v1167, 16
      %v1192 = vor.u32 %v1190, %v1188
      %v1194 = vshll.u32 %v1168, 16
      %v1196 = vrot.slane %v1194, 1
      %v1197 = vsel %vm543, %v1192, %v1196
      %v1198 = vshrl.u32 %v1168, 16
      %v1200 = vor.u32 %v1198, %v1196
      %v1202 = vshll.u32 %v1169, 16
      %v1204 = vrot.slane %v1202, 1
      %v1205 = vsel %vm543, %v1200, %v1204
      %v1206 = vshrl.u32 %v1169, 16
      %v1208 = vor.u32 %v1206, %v1204
      %v1210 = vsel %vm299, %v1181, 0
      %v1213 = vsel %vm299, %v1189, 0
      %v1216 = vsel %vm299, %v1197, 0
      %v1219 = vsel %vm299, %v1205, 0
      %v1222 = vsel %vm299, %v1208, 0
      %v1225 = vsel %vm315, %v1144, 0
      %1227 = vmatprep.subr.bf16.mxu0 0
      %1228 = vmatpush1.bf16.msra.mxu0 %v1225
      %1229 = vmatprep.subr.bf16.mxu0 0
      %1230 = vmatpush1.bf16.msra.mxu0 0
      %1231 = vmatprep.subr.bf16.mxu0 0
      %1232 = vmatpush1.bf16.msra.mxu0 0
      %1233 = vmatprep.subr.bf16.mxu0 0
      %1234 = vmatpush1.bf16.msra.mxu0 0
      %1235 = vmatprep.subr.bf16.mxu0 0
      %1236 = vmatpush1.bf16.msra.mxu0 0
      %1237 = vmatprep.subr.bf16.mxu0 0
      %1238 = vmatpush1.bf16.msra.mxu0 0
      %1239 = vmatprep.subr.bf16.mxu0 0
      %1240 = vmatpush1.bf16.msra.mxu0 0
      %1241 = vmatprep.subr.bf16.mxu0 0
      %1242 = vmatpush1.bf16.msra.mxu0 0
      %1243 = vmatprep.subr.bf16.mxu0 0
      %1244 = vmatpush1.bf16.msra.mxu0 0
      %1245 = vmatprep.subr.bf16.mxu0 0
      %1246 = vmatpush1.bf16.msra.mxu0 0
      %1247 = vmatprep.subr.bf16.mxu0 0
      %1248 = vmatpush1.bf16.msra.mxu0 0
      %1249 = vmatprep.subr.bf16.mxu0 0
      %1250 = vmatpush1.bf16.msra.mxu0 0
      %1251 = vmatprep.subr.bf16.mxu0 0
      %1252 = vmatpush1.bf16.msra.mxu0 0
      %1253 = vmatprep.subr.bf16.mxu0 0
      %1254 = vmatpush1.bf16.msra.mxu0 0
      %1255 = vmatprep.subr.bf16.mxu0 0
      %1256 = vmatpush1.bf16.msra.mxu0 0
      %1257 = vmatprep.subr.bf16.mxu0 0
      %1258 = vmatpush1.bf16.msra.mxu0 0
      %1259 = vmatprep.mubr.bf16.mxu0 0
      %1260 = vmatmul.mubr.bf16.gmra.mrb[0].mxu0 %v1210
      %v1261 = vpop.f32.mrb[0].mxu0
      %v1262 = vadd.f32 0.0, %v1261
      %v1263 = vpop.f32.mrb[0].mxu0
      %v1264 = vpop.f32.mrb[0].mxu0
      %v1265 = vadd.f32 0.0, %v1264
      %v1266 = vpop.f32.mrb[0].mxu0
      %1267 = vmatprep.mubr.bf16.mxu0 0
      %1268 = vmatmul.mubr.bf16.gmra.mrb[0].mxu0 %v1213
      %v1269 = vpop.f32.mrb[0].mxu0
      %v1270 = vadd.f32 0.0, %v1269
      %v1271 = vpop.f32.mrb[0].mxu0
      %v1272 = vpop.f32.mrb[0].mxu0
      %v1273 = vadd.f32 0.0, %v1272
      %v1274 = vpop.f32.mrb[0].mxu0
      %1275 = vmatprep.mubr.bf16.mxu0 0
      %1276 = vmatmul.mubr.bf16.gmra.mrb[0].mxu0 %v1216
      %v1277 = vpop.f32.mrb[0].mxu0
      %v1278 = vadd.f32 0.0, %v1277
      %v1279 = vpop.f32.mrb[0].mxu0
      %v1280 = vpop.f32.mrb[0].mxu0
      %v1281 = vadd.f32 0.0, %v1280
      %v1282 = vpop.f32.mrb[0].mxu0
      %1283 = vmatprep.mubr.bf16.mxu0 0
      %1284 = vmatmul.mubr.bf16.gmra.mrb[0].mxu0 %v1219
      %v1285 = vpop.f32.mrb[0].mxu0
      %v1286 = vadd.f32 0.0, %v1285
      %v1287 = vpop.f32.mrb[0].mxu0
      %v1288 = vpop.f32.mrb[0].mxu0
      %v1289 = vadd.f32 0.0, %v1288
      %v1290 = vpop.f32.mrb[0].mxu0
      %1291 = vmatprep.mubr.bf16.mxu0 0
      %1292 = vmatmul.mubr.bf16.gmra.mrb[0].mxu0 %v1222
      %v1293 = vpop.f32.mrb[0].mxu0
      %v1294 = vadd.f32 0.0, %v1293
      %v1295 = vpop.f32.mrb[0].mxu0
      %v1296 = vpop.f32.mrb[0].mxu0
      %v1297 = vpop.f32.mrb[0].mxu0
      %1298 = vdwg.mxu0
      %v1299 = vadd.f32 %v1122, %v1262
      %v1300 = vadd.f32 %v1123, %v1265
      %v1301 = vadd.f32 %v1124, %v1270
      %v1302 = vadd.f32 %v1125, %v1273
      %v1303 = vadd.f32 %v1126, %v1278
      %v1304 = vadd.f32 %v1127, %v1281
      %v1305 = vadd.f32 %v1128, %v1286
      %v1306 = vadd.f32 %v1129, %v1289
      %v1307 = vadd.f32 %v1130, %v1294
      %v1308 = vld [vmem:[%s262 + $0x4] sm:$0xf]
      %v1309 = vld [vmem:[%s262 + $0x8] sm:$0xf]
      %v1310 = vld [vmem:[%s262 + $0xc] sm:$0xf]
      %v1311 = vld [vmem:[%s262 + $0x10] sm:$0xf]
      %v1312 = vld [vmem:[%s262 + $0x14] sm:$0xf]
      %v1313 = vld [vmem:[%s262 + $0x18] sm:$0xf]
      %v1314 = vld [vmem:[%s262 + $0x1c] sm:$0xf]
      %v1315 = vld [vmem:[%s262 + $0x20] sm:$0xf]
      %v1316 = vld [vmem:[%s262 + $0x24] sm:$0xf]
      %v1317 = vld [vmem:[%s262 + $0x28] sm:$0x1]
      %s1318 = sadd.s32 %s258, 7
      %s1319 = smul.addr %s1318, 2
      %s1320 = scalar_lea.vmem %s0, %s1319
      %v1321 = vld [vmem:[%s1320] sm:$0x3]
      %v1332 = vunpack.c.l.b16 %v1308
      %v1333 = vunpack.c.l.b16 %v1309
      %v1334 = vunpack.c.l.b16 %v1310
      %v1335 = vunpack.c.l.b16 %v1311
      %v1336 = vunpack.c.l.b16 %v1312
      %v1337 = vunpack.c.l.b16 %v1313
      %v1338 = vunpack.c.l.b16 %v1314
      %v1339 = vunpack.c.l.b16 %v1315
      %v1340 = vunpack.c.l.b16 %v1316
      %v1341 = vunpack.c.l.b16 %v1317
      %v1342 = vpack.c.b16 %v1333, %v1332
      %v1343 = vpack.c.b16 %v1335, %v1334
      %v1344 = vpack.c.b16 %v1337, %v1336
      %v1345 = vpack.c.b16 %v1339, %v1338
      %v1346 = vpack.c.b16 %v1341, %v1340
      %v1348 = vshrl.u32 %v1342, 16
      %v1350 = vshll.u32 %v1342, 16
      %v1352 = vrot.slane %v1350, 1
      %v1353 = vor.u32 %v1348, %v1352
      %v1355 = vshll.u32 %v1343, 16
      %v1357 = vrot.slane %v1355, 1
      %v1358 = vsel %vm543, %v1353, %v1357
      %v1359 = vshrl.u32 %v1343, 16
      %v1361 = vor.u32 %v1359, %v1357
      %v1363 = vshll.u32 %v1344, 16
      %v1365 = vrot.slane %v1363, 1
      %v1366 = vsel %vm543, %v1361, %v1365
      %v1367 = vshrl.u32 %v1344, 16
      %v1369 = vor.u32 %v1367, %v1365
      %v1371 = vshll.u32 %v1345, 16
      %v1373 = vrot.slane %v1371, 1
      %v1374 = vsel %vm543, %v1369, %v1373
      %v1375 = vshrl.u32 %v1345, 16
      %v1377 = vor.u32 %v1375, %v1373
      %v1379 = vshll.u32 %v1346, 16
      %v1381 = vrot.slane %v1379, 1
      %v1382 = vsel %vm543, %v1377, %v1381
      %v1383 = vshrl.u32 %v1346, 16
      %v1385 = vor.u32 %v1383, %v1381
      %v1387 = vsel %vm299, %v1358, 0
      %v1390 = vsel %vm299, %v1366, 0
      %v1393 = vsel %vm299, %v1374, 0
      %v1396 = vsel %vm299, %v1382, 0
      %v1399 = vsel %vm299, %v1385, 0
      %v1402 = vsel %vm315, %v1321, 0
      %1404 = vmatprep.subr.bf16.mxu0 0
      %1405 = vmatpush1.bf16.msra.mxu0 %v1402
      %1406 = vmatprep.subr.bf16.mxu0 0
      %1407 = vmatpush1.bf16.msra.mxu0 0
      %1408 = vmatprep.subr.bf16.mxu0 0
      %1409 = vmatpush1.bf16.msra.mxu0 0
      %1410 = vmatprep.subr.bf16.mxu0 0
      %1411 = vmatpush1.bf16.msra.mxu0 0
      %1412 = vmatprep.subr.bf16.mxu0 0
      %1413 = vmatpush1.bf16.msra.mxu0 0
      %1414 = vmatprep.subr.bf16.mxu0 0
      %1415 = vmatpush1.bf16.msra.mxu0 0
      %1416 = vmatprep.subr.bf16.mxu0 0
      %1417 = vmatpush1.bf16.msra.mxu0 0
      %1418 = vmatprep.subr.bf16.mxu0 0
      %1419 = vmatpush1.bf16.msra.mxu0 0
      %1420 = vmatprep.subr.bf16.mxu0 0
      %1421 = vmatpush1.bf16.msra.mxu0 0
      %1422 = vmatprep.subr.bf16.mxu0 0
      %1423 = vmatpush1.bf16.msra.mxu0 0
      %1424 = vmatprep.subr.bf16.mxu0 0
      %1425 = vmatpush1.bf16.msra.mxu0 0
      %1426 = vmatprep.subr.bf16.mxu0 0
      %1427 = vmatpush1.bf16.msra.mxu0 0
      %1428 = vmatprep.subr.bf16.mxu0 0
      %1429 = vmatpush1.bf16.msra.mxu0 0
      %1430 = vmatprep.subr.bf16.mxu0 0
      %1431 = vmatpush1.bf16.msra.mxu0 0
      %1432 = vmatprep.subr.bf16.mxu0 0
      %1433 = vmatpush1.bf16.msra.mxu0 0
      %1434 = vmatprep.subr.bf16.mxu0 0
      %1435 = vmatpush1.bf16.msra.mxu0 0
      %1436 = vmatprep.mubr.bf16.mxu0 0
      %1437 = vmatmul.mubr.bf16.gmra.mrb[0].mxu0 %v1387
      %v1438 = vpop.f32.mrb[0].mxu0
      %v1439 = vadd.f32 0.0, %v1438
      %v1440 = vpop.f32.mrb[0].mxu0
      %v1441 = vpop.f32.mrb[0].mxu0
      %v1442 = vadd.f32 0.0, %v1441
      %v1443 = vpop.f32.mrb[0].mxu0
      %1444 = vmatprep.mubr.bf16.mxu0 0
      %1445 = vmatmul.mubr.bf16.gmra.mrb[0].mxu0 %v1390
      %v1446 = vpop.f32.mrb[0].mxu0
      %v1447 = vadd.f32 0.0, %v1446
      %v1448 = vpop.f32.mrb[0].mxu0
      %v1449 = vpop.f32.mrb[0].mxu0
      %v1450 = vadd.f32 0.0, %v1449
      %v1451 = vpop.f32.mrb[0].mxu0
      %1452 = vmatprep.mubr.bf16.mxu0 0
      %1453 = vmatmul.mubr.bf16.gmra.mrb[0].mxu0 %v1393
      %v1454 = vpop.f32.mrb[0].mxu0
      %v1455 = vadd.f32 0.0, %v1454
      %v1456 = vpop.f32.mrb[0].mxu0
      %v1457 = vpop.f32.mrb[0].mxu0
      %v1458 = vadd.f32 0.0, %v1457
      %v1459 = vpop.f32.mrb[0].mxu0
      %1460 = vmatprep.mubr.bf16.mxu0 0
      %1461 = vmatmul.mubr.bf16.gmra.mrb[0].mxu0 %v1396
      %v1462 = vpop.f32.mrb[0].mxu0
      %v1463 = vadd.f32 0.0, %v1462
      %v1464 = vpop.f32.mrb[0].mxu0
      %v1465 = vpop.f32.mrb[0].mxu0
      %v1466 = vadd.f32 0.0, %v1465
      %v1467 = vpop.f32.mrb[0].mxu0
      %1468 = vmatprep.mubr.bf16.mxu0 0
      %1469 = vmatmul.mubr.bf16.gmra.mrb[0].mxu0 %v1399
      %v1470 = vpop.f32.mrb[0].mxu0
      %v1471 = vadd.f32 0.0, %v1470
      %v1472 = vpop.f32.mrb[0].mxu0
      %v1473 = vpop.f32.mrb[0].mxu0
      %v1474 = vpop.f32.mrb[0].mxu0
      %1475 = vdwg.mxu0
      %v1476 = vadd.f32 %v1299, %v1439
      %v1477 = vadd.f32 %v1300, %v1442
      %v1478 = vadd.f32 %v1301, %v1447
      %v1479 = vadd.f32 %v1302, %v1450
      %v1480 = vadd.f32 %v1303, %v1455
      %v1481 = vadd.f32 %v1304, %v1458
      %v1482 = vadd.f32 %v1305, %v1463
      %v1483 = vadd.f32 %v1306, %v1466
      %v1484 = vadd.f32 %v1307, %v1471
      %v1485 = vld [vmem:[%s216 + $0x4] sm:$0xe]
      %s1486 = sadd.s32 %s258, 8
      %s1487 = smul.addr %s1486, 2
      %s1488 = scalar_lea.vmem %s0, %s1487
      %v1489 = vld [vmem:[%s1488] sm:$0x3]
      %v1491 = vunpack.c.l.b16 %v1485
      %v1492 = vpack.c.b16 %v1156, %v1491
      %vm1493 = vcmask 1046528
      %v1494 = vrot.slane %v1492, 1
      %v1495 = vrot.slane %v1166, 1
      %v1496 = vsel %vm1493, %v1494, %v1495
      %v1497 = vrot.slane %v1167, 1
      %v1498 = vsel %vm1493, %v1495, %v1497
      %v1499 = vrot.slane %v1168, 1
      %v1500 = vsel %vm1493, %v1497, %v1499
      %v1501 = vrot.slane %v1169, 1
      %v1502 = vsel %vm1493, %v1499, %v1501
      %v1504 = vsel %vm299, %v1496, 0
      %v1507 = vsel %vm299, %v1498, 0
      %v1510 = vsel %vm299, %v1500, 0
      %v1513 = vsel %vm299, %v1502, 0
      %v1516 = vsel %vm299, %v1501, 0
      %v1519 = vsel %vm315, %v1489, 0
      %1521 = vmatprep.subr.bf16.mxu0 0
      %1522 = vmatpush1.bf16.msra.mxu0 %v1519
      %1523 = vmatprep.subr.bf16.mxu0 0
      %1524 = vmatpush1.bf16.msra.mxu0 0
      %1525 = vmatprep.subr.bf16.mxu0 0
      %1526 = vmatpush1.bf16.msra.mxu0 0
      %1527 = vmatprep.subr.bf16.mxu0 0
      %1528 = vmatpush1.bf16.msra.mxu0 0
      %1529 = vmatprep.subr.bf16.mxu0 0
      %1530 = vmatpush1.bf16.msra.mxu0 0
      %1531 = vmatprep.subr.bf16.mxu0 0
      %1532 = vmatpush1.bf16.msra.mxu0 0
      %1533 = vmatprep.subr.bf16.mxu0 0
      %1534 = vmatpush1.bf16.msra.mxu0 0
      %1535 = vmatprep.subr.bf16.mxu0 0
      %1536 = vmatpush1.bf16.msra.mxu0 0
      %1537 = vmatprep.subr.bf16.mxu0 0
      %1538 = vmatpush1.bf16.msra.mxu0 0
      %1539 = vmatprep.subr.bf16.mxu0 0
      %1540 = vmatpush1.bf16.msra.mxu0 0
      %1541 = vmatprep.subr.bf16.mxu0 0
      %1542 = vmatpush1.bf16.msra.mxu0 0
      %1543 = vmatprep.subr.bf16.mxu0 0
      %1544 = vmatpush1.bf16.msra.mxu0 0
      %1545 = vmatprep.subr.bf16.mxu0 0
      %1546 = vmatpush1.bf16.msra.mxu0 0
      %1547 = vmatprep.subr.bf16.mxu0 0
      %1548 = vmatpush1.bf16.msra.mxu0 0
      %1549 = vmatprep.subr.bf16.mxu0 0
      %1550 = vmatpush1.bf16.msra.mxu0 0
      %1551 = vmatprep.subr.bf16.mxu0 0
      %1552 = vmatpush1.bf16.msra.mxu0 0
      %1553 = vmatprep.mubr.bf16.mxu0 0
      %1554 = vmatmul.mubr.bf16.gmra.mrb[0].mxu0 %v1504
      %v1555 = vpop.f32.mrb[0].mxu0
      %v1556 = vadd.f32 0.0, %v1555
      %v1557 = vpop.f32.mrb[0].mxu0
      %v1558 = vpop.f32.mrb[0].mxu0
      %v1559 = vadd.f32 0.0, %v1558
      %v1560 = vpop.f32.mrb[0].mxu0
      %1561 = vmatprep.mubr.bf16.mxu0 0
      %1562 = vmatmul.mubr.bf16.gmra.mrb[0].mxu0 %v1507
      %v1563 = vpop.f32.mrb[0].mxu0
      %v1564 = vadd.f32 0.0, %v1563
      %v1565 = vpop.f32.mrb[0].mxu0
      %v1566 = vpop.f32.mrb[0].mxu0
      %v1567 = vadd.f32 0.0, %v1566
      %v1568 = vpop.f32.mrb[0].mxu0
      %1569 = vmatprep.mubr.bf16.mxu0 0
      %1570 = vmatmul.mubr.bf16.gmra.mrb[0].mxu0 %v1510
      %v1571 = vpop.f32.mrb[0].mxu0
      %v1572 = vadd.f32 0.0, %v1571
      %v1573 = vpop.f32.mrb[0].mxu0
      %v1574 = vpop.f32.mrb[0].mxu0
      %v1575 = vadd.f32 0.0, %v1574
      %v1576 = vpop.f32.mrb[0].mxu0
      %1577 = vmatprep.mubr.bf16.mxu0 0
      %1578 = vmatmul.mubr.bf16.gmra.mrb[0].mxu0 %v1513
      %v1579 = vpop.f32.mrb[0].mxu0
      %v1580 = vadd.f32 0.0, %v1579
      %v1581 = vpop.f32.mrb[0].mxu0
      %v1582 = vpop.f32.mrb[0].mxu0
      %v1583 = vadd.f32 0.0, %v1582
      %v1584 = vpop.f32.mrb[0].mxu0
      %1585 = vmatprep.mubr.bf16.mxu0 0
      %1586 = vmatmul.mubr.bf16.gmra.mrb[0].mxu0 %v1516
      %v1587 = vpop.f32.mrb[0].mxu0
      %v1588 = vadd.f32 0.0, %v1587
      %v1589 = vpop.f32.mrb[0].mxu0
      %v1590 = vpop.f32.mrb[0].mxu0
      %v1591 = vpop.f32.mrb[0].mxu0
      %1592 = vdwg.mxu0
      %v1593 = vadd.f32 %v1476, %v1556
      %v1594 = vadd.f32 %v1477, %v1559
      %v1595 = vadd.f32 %v1478, %v1564
      %v1596 = vadd.f32 %v1479, %v1567
      %v1597 = vadd.f32 %v1480, %v1572
      %v1598 = vadd.f32 %v1481, %v1575
      %v1599 = vadd.f32 %v1482, %v1580
      %v1600 = vadd.f32 %v1483, %v1583
      %v1601 = vadd.f32 %v1484, %v1588
      %v1602 = vld [vmem:[#allocation2] sm:$0xff]
      %v1603 = vld [vmem:[#allocation2 + $0x8] sm:$0xff]
      %v1604 = vld [vmem:[#allocation2 + $0x10] sm:$0xff]
      %v1605 = vld [vmem:[#allocation2 + $0x18] sm:$0xff]
      %v1606 = vld [vmem:[#allocation2 + $0x20] sm:$0xff]
      %v1607 = vld [vmem:[#allocation2 + $0x28] sm:$0xff]
      %v1608 = vld [vmem:[#allocation2 + $0x30] sm:$0xff]
      %v1609 = vld [vmem:[#allocation2 + $0x38] sm:$0xff]
      %v1610 = vld [vmem:[#allocation2 + $0x40] sm:$0xff]
      %v1611 = vadd.f32 %v1602, %v1593
      %v1612 = vadd.f32 %v1603, %v1594
      %v1613 = vadd.f32 %v1604, %v1595
      %v1614 = vadd.f32 %v1605, %v1596
      %v1615 = vadd.f32 %v1606, %v1597
      %v1616 = vadd.f32 %v1607, %v1598
      %v1617 = vadd.f32 %v1608, %v1599
      %v1618 = vadd.f32 %v1609, %v1600
      %v1619 = vadd.f32 %v1610, %v1601
      %1620 = vst [vmem:[#allocation2] sm:$0xff] %v1611
      %1621 = vst [vmem:[#allocation2 + $0x8] sm:$0xff] %v1612
      %1622 = vst [vmem:[#allocation2 + $0x10] sm:$0xff] %v1613
      %1623 = vst [vmem:[#allocation2 + $0x18] sm:$0xff] %v1614
      %1624 = vst [vmem:[#allocation2 + $0x20] sm:$0xff] %v1615
      %1625 = vst [vmem:[#allocation2 + $0x28] sm:$0xff] %v1616
      %1626 = vst [vmem:[#allocation2 + $0x30] sm:$0xff] %v1617
      %1627 = vst [vmem:[#allocation2 + $0x38] sm:$0xff] %v1618
      %1628 = vst [vmem:[#allocation2 + $0x40] sm:$0xff] %v1619
      %p1629 = scmp.eq.s32.totalorder %s21, 2
      // Predicated region
      $region37: #{easyanimate_downsampler3d.1} parent=31 // pred_check
        %p1630 = pneg %p1629
      $region38: #{easyanimate_downsampler3d.1} parent=31 // pred_check_branch
        %1632 = sbr.rel (%p1630) target = $region40
      $region39: #{easyanimate_downsampler3d.1} parent=31 // pred_region
        %v1633 = vld [vmem:[#allocation2] sm:$0xff]
        %v1634 = vld [vmem:[#allocation2 + $0x8] sm:$0xff]
        %v1635 = vld [vmem:[#allocation2 + $0x10] sm:$0xff]
        %v1636 = vld [vmem:[#allocation2 + $0x18] sm:$0xff]
        %v1637 = vld [vmem:[#allocation2 + $0x20] sm:$0xff]
        %v1638 = vld [vmem:[#allocation2 + $0x28] sm:$0xff]
        %v1639 = vld [vmem:[#allocation2 + $0x30] sm:$0xff]
        %v1640 = vld [vmem:[#allocation2 + $0x38] sm:$0xff]
        %v1641 = vld [vmem:[#allocation2 + $0x40] sm:$0xff]
        %v1642 = vpack.c.bf16 %v1634, %v1633
        %v1643 = vpack.c.bf16 %v1636, %v1635
        %v1644 = vpack.c.bf16 %v1638, %v1637
        %v1645 = vpack.c.bf16 %v1640, %v1639
        %v1646 = vpack.c.bf16 %v1641, %v1641
        %v1652 = vunpack.c.l.b16 %v1642
        %v1653 = vunpack.c.h.b16 %v1642
        %v1654 = vunpack.c.l.b16 %v1643
        %v1655 = vunpack.c.h.b16 %v1643
        %v1656 = vunpack.c.l.b16 %v1644
        %v1657 = vunpack.c.h.b16 %v1644
        %v1658 = vunpack.c.l.b16 %v1645
        %v1659 = vunpack.c.h.b16 %v1645
        %v1660 = vunpack.c.l.b16 %v1646
        %v1661 = vpack.c.b16 %v1652, %v1652
        %v1662 = vpack.c.b16 %v1653, %v1653
        %v1663 = vpack.c.b16 %v1654, %v1654
        %v1664 = vpack.c.b16 %v1655, %v1655
        %v1665 = vpack.c.b16 %v1656, %v1656
        %v1666 = vpack.c.b16 %v1657, %v1657
        %v1667 = vpack.c.b16 %v1658, %v1658
        %v1668 = vpack.c.b16 %v1659, %v1659
        %v1669 = vpack.c.b16 %v1660, %v1660
        %1679 = vst [vmem:[%s227] sm:$0xf] %v1661
        %1680 = vst [vmem:[%s227 + $0x4] sm:$0xf] %v1662
        %1681 = vst [vmem:[%s227 + $0x8] sm:$0xf] %v1663
        %1682 = vst [vmem:[%s227 + $0xc] sm:$0xf] %v1664
        %1683 = vst [vmem:[%s227 + $0x10] sm:$0xf] %v1665
        %1684 = vst [vmem:[%s227 + $0x14] sm:$0xf] %v1666
        %1685 = vst [vmem:[%s227 + $0x18] sm:$0xf] %v1667
        %1686 = vst [vmem:[%s227 + $0x1c] sm:$0xf] %v1668
        %1687 = vst [vmem:[%s227 + $0x20] sm:$0xf] %v1669
      $region40: #{easyanimate_downsampler3d.1} parent=31 // pred_fallthru
        _
      %p1688 = scmp.lt.s32.totalorder %s19, 1
      %s1689 = scalar_select %p1688, %s19, 1
      %p1690 = scmp.lt.s32.totalorder %s20, 3
      %s1691 = scalar_select %p1690, %s20, 3
      %s1692 = smul.addr %s1691, 9
      %s1693 = smul.addr %s1689, 36
      %s1694 = sadd.s32 %s1692, %s1693
      %s1695 = smul.addr %s1694, 4
      %s1696 = scalar_lea.vmem %s3, %s1695
      // Predicated region
      $region41: #{easyanimate_downsampler3d.1} parent=31 // pred_check
        %p1697 = pneg %p127
      $region42: #{easyanimate_downsampler3d.1} parent=31 // pred_check_branch
        %1699 = sbr.rel (%p1697) target = $region44
      $region43: #{easyanimate_downsampler3d.1} parent=31 // pred_region
        _
      $region44: #{easyanimate_downsampler3d.1} parent=31 // pred_fallthru
        _
    $region32: #{easyanimate_downsampler3d.1} parent=5 // pred_fallthru
      _
    %p1700 = scmp.le.s32.totalorder 2, %s9
    // Predicated region
    $region45: #{easyanimate_downsampler3d.1} parent=5 // pred_check
      %p1701 = pneg %p1700
    $region46: #{easyanimate_downsampler3d.1} parent=5 // pred_check_branch
      %1703 = sbr.rel (%p1701) target = $region48
    $region47: #{easyanimate_downsampler3d.1} parent=5 // pred_region
      %s1704 = ssub.s32 %s9, 2
      // Predicated region
      $region49: #{easyanimate_downsampler3d.1} parent=47 // pred_check
        %p1705 = pneg %p133
      $region50: #{easyanimate_downsampler3d.1} parent=47 // pred_check_branch
        %1707 = sbr.rel (%p1705) target = $region52
      $region51: #{easyanimate_downsampler3d.1} parent=47 // pred_region
        %p1708 = scmp.lt.s32.totalorder %s22, 1
        %s1709 = scalar_select %p1708, %s22, 1
        %p1710 = scmp.lt.s32.totalorder %s23, 3
        %s1711 = scalar_select %p1710, %s23, 3
        %s1712 = smul.addr %s1711, 9
        %s1713 = smul.addr %s1709, 36
        %s1714 = sadd.s32 %s1712, %s1713
        %s1715 = smul.addr %s1714, 4
        %s1716 = scalar_lea.vmem %s3, %s1715
      $region52: #{easyanimate_downsampler3d.1} parent=47 // pred_fallthru
        _
    $region48: #{easyanimate_downsampler3d.1} parent=5 // pred_fallthru
      _
  $region6: #{easyanimate_downsampler3d.1} parent=0 // loop_footer
    %s13 = sadd.s32 1, %s9
  $region7: #{easyanimate_downsampler3d.1} parent=0 // loop_footer_branch
    %8 = sbr.rel target = $region3
  $region8: #{easyanimate_downsampler3d.1} parent=0 // loop_exit
    _

</llo_original>
